<compile_context>
chip_gen: v7x
topology: tpu7x:2x2x1
jax: 0.10.0
libtpu: 0.0.40
codegen_flags: <defaults>
</compile_context>

<pallas_src>
import functools

import jax
import jax.numpy as jnp
import numpy as np
from jax.experimental import pallas as pl
from jax.experimental.pallas import tpu as pltpu


# ---------------------------------------------------------------------------
# Fused Pallas kernel: all LSTM layers + final Linear(H, 1)
# ---------------------------------------------------------------------------
def _fused_lstm_model_kernel(*args, num_layers, hidden_size, seq_len, batch):
    """args = (x_ref, [w_ih, w_hh, b] * num_layers, fc_w, fc_b, out_ref).

    x_ref   : (T*B, D)  time-major rows (timestep-major blocks of B rows), B padded to 8
    w_ih    : (D, 4H)   input->gates weight  (transposed vs PyTorch, i/f/o cols pre-scaled by 0.5)
    w_hh    : (H, 4H)   hidden->gates weight (transposed vs PyTorch, i/f/o cols pre-scaled by 0.5)
    b       : (1, 4H)   (b_ih + b_hh), i/f/o lanes pre-scaled by 0.5
    fc_w    : (H, 1), fc_b: (1, 1)
    out_ref : (B, 1)
    """
    H, T, B = hidden_size, seq_len, batch
    x_ref = args[0]
    layer_refs = args[1:1 + 3 * num_layers]
    fc_w_ref = args[1 + 3 * num_layers]
    fc_b_ref = args[2 + 3 * num_layers]
    out_ref = args[-1]

    # Post-tanh affine implementing sigmoid for i/f/o lanes (the matching 0.5
    # pre-scale is already folded into the weights):
    #   sigmoid(x) = 0.5 * tanh(x/2) + 0.5   -> scale 0.5, offset 0.5
    #   g lanes: plain tanh                  -> scale 1.0, offset 0.0
    # Hoisted once — (B, 4H) = one (8,128) vreg; JAX does not CSE broadcasts in loops.
    lane = jax.lax.broadcasted_iota(jnp.int32, (B, 4 * H), 1)
    is_g = jnp.logical_and(lane >= 2 * H, lane < 3 * H)
    post_scale = jnp.where(is_g, 1.0, 0.5).astype(jnp.float32)
    post_off = jnp.where(is_g, 0.0, 0.5).astype(jnp.float32)

    seq = x_ref[...]                                   # (T*B, D_in)

    h_below = None   # per-step (B, H) outputs of the previous layer
    h_last = None
    for layer in range(num_layers):
        w_ih = layer_refs[3 * layer][...]              # (D, 4H)
        w_hh = layer_refs[3 * layer + 1][...]          # (H, 4H)
        b = layer_refs[3 * layer + 2][...]             # (1, 4H)

        h = jnp.zeros((B, H), jnp.float32)
        c = jnp.zeros((B, H), jnp.float32)

        if layer == 0:
            # Hoisted input projection: one matmul covering all T timesteps
            # (the whole input sequence is available up front).
            xp = jnp.dot(seq, w_ih, preferred_element_type=jnp.float32) + b  # (T*B, 4H)
            xps = [xp[t * B:(t + 1) * B, :] for t in range(T)]

        outs = []
        for t in range(T):                             # statically unrolled recurrence
            if layer == 0:
                xp_t = xps[t]
            else:
                # Wavefront: depends only on the SAME-timestep output of the
                # layer below, so this layer's step t overlaps with the layer
                # below's step t+1 in the scheduled trace.
                xp_t = jnp.dot(h_below[t], w_ih,
                               preferred_element_type=jnp.float32) + b      # (B, 4H)
            gates = xp_t + jnp.dot(h, w_hh, preferred_element_type=jnp.float32)
            th = jnp.tanh(gates)                       # one EUP push for all 4 gates
            act = th * post_scale + post_off           # sigmoid / tanh per lane, no select
            i_g = act[:, 0 * H:1 * H]
            f_g = act[:, 1 * H:2 * H]
            g_g = act[:, 2 * H:3 * H]
            o_g = act[:, 3 * H:4 * H]
            c = f_g * c + i_g * g_g
            h = o_g * jnp.tanh(c)
            outs.append(h)
        h_below = outs
        h_last = h

    # Final Linear(H, 1) on h_n[-1], fused (no extra launch / HBM round-trip).
    out_ref[...] = (
        jnp.dot(h_last, fc_w_ref[...], preferred_element_type=jnp.float32)
        + fc_b_ref[...]
    )


# ---------------------------------------------------------------------------
# Wrapper
# ---------------------------------------------------------------------------
def lstm_model_forward(x_btd, packed):
    """Full LSTMModel.forward.  x_btd: (B, T, D) batch_first.  Returns (B, 1)."""
    B, T, D = x_btd.shape
    H = packed["fc_w_t"].shape[0]
    layers = packed["lstm_layers"]
    num_layers = len(layers)

    # Pad batch to one f32 sublane tile (multiple of 8). Padded rows see zero
    # inputs / zero initial state; their results are sliced off afterwards.
    B_pad = max(8, ((B + 7) // 8) * 8)
    if B_pad != B:
        x_btd = jnp.pad(x_btd, ((0, B_pad - B), (0, 0), (0, 0)))

    # batch_first (B_pad, T, D) -> time-major rows (T*B_pad, D)
    x_tm = jnp.transpose(x_btd, (1, 0, 2)).reshape(T * B_pad, D)

    flat_w = []
    for (w_ih_t, w_hh_t, b) in layers:
        flat_w += [w_ih_t, w_hh_t, b]
    operands = [x_tm, *flat_w, packed["fc_w_t"], packed["fc_b"]]

    kernel = functools.partial(
        _fused_lstm_model_kernel,
        num_layers=num_layers, hidden_size=H, seq_len=T, batch=B_pad)

    out_pad = pl.pallas_call(
        kernel,
        out_shape=jax.ShapeDtypeStruct((B_pad, 1), jnp.float32),
        # Whole arrays resident in VMEM; no grid -> no double-buffering of
        # loop-invariant weights, single kernel invocation.
        in_specs=[pl.BlockSpec(memory_space=pltpu.MemorySpace.VMEM)
                  for _ in operands],
        out_specs=pl.BlockSpec(memory_space=pltpu.MemorySpace.VMEM),
    )(*operands)
    return out_pad[:B]


# ---------------------------------------------------------------------------
# Parameter init (PyTorch convention) + one-time kernel packing
# ---------------------------------------------------------------------------
def init_params(key, input_size, hidden_size, num_layers):
    """PyTorch-style uniform(-1/sqrt(H), 1/sqrt(H)); PyTorch layouts."""
    H = hidden_size
    bound = 1.0 / np.sqrt(H)
    layers = []
    for layer in range(num_layers):
        D = input_size if layer == 0 else H
        key, k1, k2, k3, k4 = jax.random.split(key, 5)
        w_ih = jax.random.uniform(k1, (4 * H, D), jnp.float32, -bound, bound)
        w_hh = jax.random.uniform(k2, (4 * H, H), jnp.float32, -bound, bound)
        b_ih = jax.random.uniform(k3, (4 * H,), jnp.float32, -bound, bound)
        b_hh = jax.random.uniform(k4, (4 * H,), jnp.float32, -bound, bound)
        layers.append((w_ih, w_hh, b_ih, b_hh))
    key, k5, k6 = jax.random.split(key, 3)
    fc_w = jax.random.uniform(k5, (1, H), jnp.float32, -bound, bound)
    fc_b = jax.random.uniform(k6, (1,), jnp.float32, -bound, bound)
    return {"lstm": layers, "fc_w": fc_w, "fc_b": fc_b}


def pack_params(raw):
    """One-time transform to kernel layout:
    transpose weights, fuse biases, and fold the 0.5 sigmoid prescale into the
    i/f/o gate rows (exact — sigmoid(x) = 0.5*tanh(0.5*x) + 0.5)."""
    H = raw["fc_w"].shape[1]
    pre = np.full((4 * H,), 0.5, np.float32)
    pre[2 * H:3 * H] = 1.0                      # g gate: plain tanh, no prescale
    pre = jnp.asarray(pre)
    layers = []
    for (w_ih, w_hh, b_ih, b_hh) in raw["lstm"]:
        layers.append(((w_ih * pre[:, None]).T,             # (D, 4H)
                       (w_hh * pre[:, None]).T,             # (H, 4H)
                       ((b_ih + b_hh) * pre)[None, :]))      # (1, 4H)
    return {"lstm_layers": layers,
            "fc_w_t": raw["fc_w"].T,            # (H, 1)
            "fc_b": raw["fc_b"][None, :]}       # (1, 1)


# ---------------------------------------------------------------------------
# Pure-JAX reference (PyTorch formulation with standard sigmoid)
# ---------------------------------------------------------------------------
def lstm_model_reference(x_btd, raw):
    x = jnp.transpose(x_btd, (1, 0, 2))  # (T, B, D)
    for (w_ih, w_hh, b_ih, b_hh) in raw["lstm"]:
        H = w_hh.shape[1]
        B = x.shape[1]

        def step(carry, x_t):
            h, c = carry
            gates = x_t @ w_ih.T + h @ w_hh.T + b_ih + b_hh
            i = jax.nn.sigmoid(gates[:, 0 * H:1 * H])
            f = jax.nn.sigmoid(gates[:, 1 * H:2 * H])
            g = jnp.tanh(gates[:, 2 * H:3 * H])
            o = jax.nn.sigmoid(gates[:, 3 * H:4 * H])
            c = f * c + i * g
            h = o * jnp.tanh(c)
            return (h, c), h

        init = (jnp.zeros((B, H), jnp.float32), jnp.zeros((B, H), jnp.float32))
        _, ys = jax.lax.scan(step, init, x)
        x = ys
    return x[-1] @ raw["fc_w"].T + raw["fc_b"]


# ---------------------------------------------------------------------------
if __name__ == "__main__":
    input_size, hidden_size, num_layers, dropout = 8, 32, 2, 0.0
    batch, seq = 2, 8

    key = jax.random.PRNGKey(0)
    key, pkey, xkey = jax.random.split(key, 3)
    raw_params = init_params(pkey, input_size, hidden_size, num_layers)
    packed_params = pack_params(raw_params)
    x = jax.random.normal(xkey, (batch, seq, input_size), jnp.float32)

    out = lstm_model_forward(x, packed_params)
    out = jax.block_until_ready(out)
    assert out.shape == (batch, 1), out.shape

    ref = jax.block_until_ready(lstm_model_reference(x, raw_params))
    # sigmoid-via-tanh with the folded prescale is mathematically exact;
    # tolerance covers f32 rounding differences vs the XLA reference.
    assert np.allclose(np.asarray(out), np.asarray(ref), atol=1e-4, rtol=1e-4)

    print("KERNEL_OK")
</pallas_src>

<mosaic_0001>
module attributes {stable_mosaic.version = 11 : i64} {
  func.func @_fused_lstm_model_kernel(%arg0: memref<64x8xf32, #tpu.memory_space<vmem>>, %arg1: memref<8x128xf32, #tpu.memory_space<vmem>>, %arg2: memref<32x128xf32, #tpu.memory_space<vmem>>, %arg3: memref<1x128xf32, #tpu.memory_space<vmem>>, %arg4: memref<32x128xf32, #tpu.memory_space<vmem>>, %arg5: memref<32x128xf32, #tpu.memory_space<vmem>>, %arg6: memref<1x128xf32, #tpu.memory_space<vmem>>, %arg7: memref<32x1xf32, #tpu.memory_space<vmem>>, %arg8: memref<1x1xf32, #tpu.memory_space<vmem>>, %arg9: memref<8x1xf32, #tpu.memory_space<vmem>>) attributes {dimension_semantics = [], scalar_prefetch = 0 : i64, scratch_operands = 0 : i64, tpu.core_type = #tpu.core_type<tc>} {
    %0 = tpu.iota {dimensions = array<i32: 1>} : vector<8x128xi32>
    %c64_i32 = arith.constant 64 : i32
    %1 = vector.broadcast %c64_i32 : i32 to vector<8x128xi32>
    %2 = arith.cmpi sge, %0, %1 : vector<8x128xi32>
    %c96_i32 = arith.constant 96 : i32
    %3 = vector.broadcast %c96_i32 : i32 to vector<8x128xi32>
    %4 = arith.cmpi slt, %0, %3 : vector<8x128xi32>
    %5 = arith.andi %2, %4 : vector<8x128xi1>
    %cst = arith.constant 1.000000e+00 : f32
    %cst_0 = arith.constant 5.000000e-01 : f32
    %6 = vector.broadcast %cst : f32 to vector<8x128xf32>
    %7 = vector.broadcast %cst_0 : f32 to vector<8x128xf32>
    %8 = arith.select %5, %6, %7 : vector<8x128xi1>, vector<8x128xf32>
    %cst_1 = arith.constant 0.000000e+00 : f32
    %cst_2 = arith.constant 5.000000e-01 : f32
    %9 = vector.broadcast %cst_1 : f32 to vector<8x128xf32>
    %10 = vector.broadcast %cst_2 : f32 to vector<8x128xf32>
    %11 = arith.select %5, %9, %10 : vector<8x128xi1>, vector<8x128xf32>
    %c0 = arith.constant 0 : index
    %c0_3 = arith.constant 0 : index
    %12 = vector.load %arg0[%c0, %c0_3] : memref<64x8xf32, #tpu.memory_space<vmem>>, vector<64x8xf32>
    %c0_4 = arith.constant 0 : index
    %c0_5 = arith.constant 0 : index
    %13 = vector.load %arg1[%c0_4, %c0_5] : memref<8x128xf32, #tpu.memory_space<vmem>>, vector<8x128xf32>
    %c0_6 = arith.constant 0 : index
    %c0_7 = arith.constant 0 : index
    %14 = vector.load %arg2[%c0_6, %c0_7] : memref<32x128xf32, #tpu.memory_space<vmem>>, vector<32x128xf32>
    %c0_8 = arith.constant 0 : index
    %c0_9 = arith.constant 0 : index
    %15 = vector.load %arg3[%c0_8, %c0_9] : memref<1x128xf32, #tpu.memory_space<vmem>>, vector<1x128xf32>
    %cst_10 = arith.constant 0.000000e+00 : f32
    %16 = vector.broadcast %cst_10 : f32 to vector<8x32xf32>
    %cst_11 = arith.constant 0.000000e+00 : f32
    %17 = vector.broadcast %cst_11 : f32 to vector<8x32xf32>
    %cst_12 = arith.constant dense<0.000000e+00> : vector<64x128xf32>
    %18 = tpu.matmul %12, %13, %cst_12 {dimension_numbers = #tpu.dot_dimension_numbers<[1], [0], [0], [1], [0, 0, 1, 1], [], []>} : vector<64x8xf32>, vector<8x128xf32>, vector<64x128xf32> -> vector<64x128xf32>
    %19 = vector.broadcast %15 : vector<1x128xf32> to vector<64x128xf32>
    %20 = arith.addf %18, %19 : vector<64x128xf32>
    %21 = vector.extract_strided_slice %20 {offsets = [0, 0], sizes = [8, 128], strides = [1, 1]} : vector<64x128xf32> to vector<8x128xf32>
    %22 = vector.extract_strided_slice %20 {offsets = [8, 0], sizes = [8, 128], strides = [1, 1]} : vector<64x128xf32> to vector<8x128xf32>
    %23 = vector.extract_strided_slice %20 {offsets = [16, 0], sizes = [8, 128], strides = [1, 1]} : vector<64x128xf32> to vector<8x128xf32>
    %24 = vector.extract_strided_slice %20 {offsets = [24, 0], sizes = [8, 128], strides = [1, 1]} : vector<64x128xf32> to vector<8x128xf32>
    %25 = vector.extract_strided_slice %20 {offsets = [32, 0], sizes = [8, 128], strides = [1, 1]} : vector<64x128xf32> to vector<8x128xf32>
    %26 = vector.extract_strided_slice %20 {offsets = [40, 0], sizes = [8, 128], strides = [1, 1]} : vector<64x128xf32> to vector<8x128xf32>
    %27 = vector.extract_strided_slice %20 {offsets = [48, 0], sizes = [8, 128], strides = [1, 1]} : vector<64x128xf32> to vector<8x128xf32>
    %28 = vector.extract_strided_slice %20 {offsets = [56, 0], sizes = [8, 128], strides = [1, 1]} : vector<64x128xf32> to vector<8x128xf32>
    %cst_13 = arith.constant dense<0.000000e+00> : vector<8x128xf32>
    %29 = tpu.matmul %16, %14, %cst_13 {dimension_numbers = #tpu.dot_dimension_numbers<[1], [0], [0], [1], [0, 0, 1, 1], [], []>} : vector<8x32xf32>, vector<32x128xf32>, vector<8x128xf32> -> vector<8x128xf32>
    %30 = arith.addf %21, %29 : vector<8x128xf32>
    %31 = math.tanh %30 : vector<8x128xf32>
    %32 = arith.mulf %31, %8 : vector<8x128xf32>
    %33 = arith.addf %32, %11 : vector<8x128xf32>
    %34 = vector.extract_strided_slice %33 {offsets = [0, 0], sizes = [8, 32], strides = [1, 1]} : vector<8x128xf32> to vector<8x32xf32>
    %35 = vector.extract_strided_slice %33 {offsets = [0, 32], sizes = [8, 32], strides = [1, 1]} : vector<8x128xf32> to vector<8x32xf32>
    %36 = vector.extract_strided_slice %33 {offsets = [0, 64], sizes = [8, 32], strides = [1, 1]} : vector<8x128xf32> to vector<8x32xf32>
    %37 = vector.extract_strided_slice %33 {offsets = [0, 96], sizes = [8, 32], strides = [1, 1]} : vector<8x128xf32> to vector<8x32xf32>
    %38 = arith.mulf %35, %17 : vector<8x32xf32>
    %39 = arith.mulf %34, %36 : vector<8x32xf32>
    %40 = arith.addf %38, %39 : vector<8x32xf32>
    %41 = math.tanh %40 : vector<8x32xf32>
    %42 = arith.mulf %37, %41 : vector<8x32xf32>
    %cst_14 = arith.constant dense<0.000000e+00> : vector<8x128xf32>
    %43 = tpu.matmul %42, %14, %cst_14 {dimension_numbers = #tpu.dot_dimension_numbers<[1], [0], [0], [1], [0, 0, 1, 1], [], []>} : vector<8x32xf32>, vector<32x128xf32>, vector<8x128xf32> -> vector<8x128xf32>
    %44 = arith.addf %22, %43 : vector<8x128xf32>
    %45 = math.tanh %44 : vector<8x128xf32>
    %46 = arith.mulf %45, %8 : vector<8x128xf32>
    %47 = arith.addf %46, %11 : vector<8x128xf32>
    %48 = vector.extract_strided_slice %47 {offsets = [0, 0], sizes = [8, 32], strides = [1, 1]} : vector<8x128xf32> to vector<8x32xf32>
    %49 = vector.extract_strided_slice %47 {offsets = [0, 32], sizes = [8, 32], strides = [1, 1]} : vector<8x128xf32> to vector<8x32xf32>
    %50 = vector.extract_strided_slice %47 {offsets = [0, 64], sizes = [8, 32], strides = [1, 1]} : vector<8x128xf32> to vector<8x32xf32>
    %51 = vector.extract_strided_slice %47 {offsets = [0, 96], sizes = [8, 32], strides = [1, 1]} : vector<8x128xf32> to vector<8x32xf32>
    %52 = arith.mulf %49, %40 : vector<8x32xf32>
    %53 = arith.mulf %48, %50 : vector<8x32xf32>
    %54 = arith.addf %52, %53 : vector<8x32xf32>
    %55 = math.tanh %54 : vector<8x32xf32>
    %56 = arith.mulf %51, %55 : vector<8x32xf32>
    %cst_15 = arith.constant dense<0.000000e+00> : vector<8x128xf32>
    %57 = tpu.matmul %56, %14, %cst_15 {dimension_numbers = #tpu.dot_dimension_numbers<[1], [0], [0], [1], [0, 0, 1, 1], [], []>} : vector<8x32xf32>, vector<32x128xf32>, vector<8x128xf32> -> vector<8x128xf32>
    %58 = arith.addf %23, %57 : vector<8x128xf32>
    %59 = math.tanh %58 : vector<8x128xf32>
    %60 = arith.mulf %59, %8 : vector<8x128xf32>
    %61 = arith.addf %60, %11 : vector<8x128xf32>
    %62 = vector.extract_strided_slice %61 {offsets = [0, 0], sizes = [8, 32], strides = [1, 1]} : vector<8x128xf32> to vector<8x32xf32>
    %63 = vector.extract_strided_slice %61 {offsets = [0, 32], sizes = [8, 32], strides = [1, 1]} : vector<8x128xf32> to vector<8x32xf32>
    %64 = vector.extract_strided_slice %61 {offsets = [0, 64], sizes = [8, 32], strides = [1, 1]} : vector<8x128xf32> to vector<8x32xf32>
    %65 = vector.extract_strided_slice %61 {offsets = [0, 96], sizes = [8, 32], strides = [1, 1]} : vector<8x128xf32> to vector<8x32xf32>
    %66 = arith.mulf %63, %54 : vector<8x32xf32>
    %67 = arith.mulf %62, %64 : vector<8x32xf32>
    %68 = arith.addf %66, %67 : vector<8x32xf32>
    %69 = math.tanh %68 : vector<8x32xf32>
    %70 = arith.mulf %65, %69 : vector<8x32xf32>
    %cst_16 = arith.constant dense<0.000000e+00> : vector<8x128xf32>
    %71 = tpu.matmul %70, %14, %cst_16 {dimension_numbers = #tpu.dot_dimension_numbers<[1], [0], [0], [1], [0, 0, 1, 1], [], []>} : vector<8x32xf32>, vector<32x128xf32>, vector<8x128xf32> -> vector<8x128xf32>
    %72 = arith.addf %24, %71 : vector<8x128xf32>
    %73 = math.tanh %72 : vector<8x128xf32>
    %74 = arith.mulf %73, %8 : vector<8x128xf32>
    %75 = arith.addf %74, %11 : vector<8x128xf32>
    %76 = vector.extract_strided_slice %75 {offsets = [0, 0], sizes = [8, 32], strides = [1, 1]} : vector<8x128xf32> to vector<8x32xf32>
    %77 = vector.extract_strided_slice %75 {offsets = [0, 32], sizes = [8, 32], strides = [1, 1]} : vector<8x128xf32> to vector<8x32xf32>
    %78 = vector.extract_strided_slice %75 {offsets = [0, 64], sizes = [8, 32], strides = [1, 1]} : vector<8x128xf32> to vector<8x32xf32>
    %79 = vector.extract_strided_slice %75 {offsets = [0, 96], sizes = [8, 32], strides = [1, 1]} : vector<8x128xf32> to vector<8x32xf32>
    %80 = arith.mulf %77, %68 : vector<8x32xf32>
    %81 = arith.mulf %76, %78 : vector<8x32xf32>
    %82 = arith.addf %80, %81 : vector<8x32xf32>
    %83 = math.tanh %82 : vector<8x32xf32>
    %84 = arith.mulf %79, %83 : vector<8x32xf32>
    %cst_17 = arith.constant dense<0.000000e+00> : vector<8x128xf32>
    %85 = tpu.matmul %84, %14, %cst_17 {dimension_numbers = #tpu.dot_dimension_numbers<[1], [0], [0], [1], [0, 0, 1, 1], [], []>} : vector<8x32xf32>, vector<32x128xf32>, vector<8x128xf32> -> vector<8x128xf32>
    %86 = arith.addf %25, %85 : vector<8x128xf32>
    %87 = math.tanh %86 : vector<8x128xf32>
    %88 = arith.mulf %87, %8 : vector<8x128xf32>
    %89 = arith.addf %88, %11 : vector<8x128xf32>
    %90 = vector.extract_strided_slice %89 {offsets = [0, 0], sizes = [8, 32], strides = [1, 1]} : vector<8x128xf32> to vector<8x32xf32>
    %91 = vector.extract_strided_slice %89 {offsets = [0, 32], sizes = [8, 32], strides = [1, 1]} : vector<8x128xf32> to vector<8x32xf32>
    %92 = vector.extract_strided_slice %89 {offsets = [0, 64], sizes = [8, 32], strides = [1, 1]} : vector<8x128xf32> to vector<8x32xf32>
    %93 = vector.extract_strided_slice %89 {offsets = [0, 96], sizes = [8, 32], strides = [1, 1]} : vector<8x128xf32> to vector<8x32xf32>
    %94 = arith.mulf %91, %82 : vector<8x32xf32>
    %95 = arith.mulf %90, %92 : vector<8x32xf32>
    %96 = arith.addf %94, %95 : vector<8x32xf32>
    %97 = math.tanh %96 : vector<8x32xf32>
    %98 = arith.mulf %93, %97 : vector<8x32xf32>
    %cst_18 = arith.constant dense<0.000000e+00> : vector<8x128xf32>
    %99 = tpu.matmul %98, %14, %cst_18 {dimension_numbers = #tpu.dot_dimension_numbers<[1], [0], [0], [1], [0, 0, 1, 1], [], []>} : vector<8x32xf32>, vector<32x128xf32>, vector<8x128xf32> -> vector<8x128xf32>
    %100 = arith.addf %26, %99 : vector<8x128xf32>
    %101 = math.tanh %100 : vector<8x128xf32>
    %102 = arith.mulf %101, %8 : vector<8x128xf32>
    %103 = arith.addf %102, %11 : vector<8x128xf32>
    %104 = vector.extract_strided_slice %103 {offsets = [0, 0], sizes = [8, 32], strides = [1, 1]} : vector<8x128xf32> to vector<8x32xf32>
    %105 = vector.extract_strided_slice %103 {offsets = [0, 32], sizes = [8, 32], strides = [1, 1]} : vector<8x128xf32> to vector<8x32xf32>
    %106 = vector.extract_strided_slice %103 {offsets = [0, 64], sizes = [8, 32], strides = [1, 1]} : vector<8x128xf32> to vector<8x32xf32>
    %107 = vector.extract_strided_slice %103 {offsets = [0, 96], sizes = [8, 32], strides = [1, 1]} : vector<8x128xf32> to vector<8x32xf32>
    %108 = arith.mulf %105, %96 : vector<8x32xf32>
    %109 = arith.mulf %104, %106 : vector<8x32xf32>
    %110 = arith.addf %108, %109 : vector<8x32xf32>
    %111 = math.tanh %110 : vector<8x32xf32>
    %112 = arith.mulf %107, %111 : vector<8x32xf32>
    %cst_19 = arith.constant dense<0.000000e+00> : vector<8x128xf32>
    %113 = tpu.matmul %112, %14, %cst_19 {dimension_numbers = #tpu.dot_dimension_numbers<[1], [0], [0], [1], [0, 0, 1, 1], [], []>} : vector<8x32xf32>, vector<32x128xf32>, vector<8x128xf32> -> vector<8x128xf32>
    %114 = arith.addf %27, %113 : vector<8x128xf32>
    %115 = math.tanh %114 : vector<8x128xf32>
    %116 = arith.mulf %115, %8 : vector<8x128xf32>
    %117 = arith.addf %116, %11 : vector<8x128xf32>
    %118 = vector.extract_strided_slice %117 {offsets = [0, 0], sizes = [8, 32], strides = [1, 1]} : vector<8x128xf32> to vector<8x32xf32>
    %119 = vector.extract_strided_slice %117 {offsets = [0, 32], sizes = [8, 32], strides = [1, 1]} : vector<8x128xf32> to vector<8x32xf32>
    %120 = vector.extract_strided_slice %117 {offsets = [0, 64], sizes = [8, 32], strides = [1, 1]} : vector<8x128xf32> to vector<8x32xf32>
    %121 = vector.extract_strided_slice %117 {offsets = [0, 96], sizes = [8, 32], strides = [1, 1]} : vector<8x128xf32> to vector<8x32xf32>
    %122 = arith.mulf %119, %110 : vector<8x32xf32>
    %123 = arith.mulf %118, %120 : vector<8x32xf32>
    %124 = arith.addf %122, %123 : vector<8x32xf32>
    %125 = math.tanh %124 : vector<8x32xf32>
    %126 = arith.mulf %121, %125 : vector<8x32xf32>
    %cst_20 = arith.constant dense<0.000000e+00> : vector<8x128xf32>
    %127 = tpu.matmul %126, %14, %cst_20 {dimension_numbers = #tpu.dot_dimension_numbers<[1], [0], [0], [1], [0, 0, 1, 1], [], []>} : vector<8x32xf32>, vector<32x128xf32>, vector<8x128xf32> -> vector<8x128xf32>
    %128 = arith.addf %28, %127 : vector<8x128xf32>
    %129 = math.tanh %128 : vector<8x128xf32>
    %130 = arith.mulf %129, %8 : vector<8x128xf32>
    %131 = arith.addf %130, %11 : vector<8x128xf32>
    %132 = vector.extract_strided_slice %131 {offsets = [0, 0], sizes = [8, 32], strides = [1, 1]} : vector<8x128xf32> to vector<8x32xf32>
    %133 = vector.extract_strided_slice %131 {offsets = [0, 32], sizes = [8, 32], strides = [1, 1]} : vector<8x128xf32> to vector<8x32xf32>
    %134 = vector.extract_strided_slice %131 {offsets = [0, 64], sizes = [8, 32], strides = [1, 1]} : vector<8x128xf32> to vector<8x32xf32>
    %135 = vector.extract_strided_slice %131 {offsets = [0, 96], sizes = [8, 32], strides = [1, 1]} : vector<8x128xf32> to vector<8x32xf32>
    %136 = arith.mulf %133, %124 : vector<8x32xf32>
    %137 = arith.mulf %132, %134 : vector<8x32xf32>
    %138 = arith.addf %136, %137 : vector<8x32xf32>
    %139 = math.tanh %138 : vector<8x32xf32>
    %140 = arith.mulf %135, %139 : vector<8x32xf32>
    %c0_21 = arith.constant 0 : index
    %c0_22 = arith.constant 0 : index
    %141 = vector.load %arg4[%c0_21, %c0_22] : memref<32x128xf32, #tpu.memory_space<vmem>>, vector<32x128xf32>
    %c0_23 = arith.constant 0 : index
    %c0_24 = arith.constant 0 : index
    %142 = vector.load %arg5[%c0_23, %c0_24] : memref<32x128xf32, #tpu.memory_space<vmem>>, vector<32x128xf32>
    %c0_25 = arith.constant 0 : index
    %c0_26 = arith.constant 0 : index
    %143 = vector.load %arg6[%c0_25, %c0_26] : memref<1x128xf32, #tpu.memory_space<vmem>>, vector<1x128xf32>
    %cst_27 = arith.constant 0.000000e+00 : f32
    %144 = vector.broadcast %cst_27 : f32 to vector<8x32xf32>
    %cst_28 = arith.constant 0.000000e+00 : f32
    %145 = vector.broadcast %cst_28 : f32 to vector<8x32xf32>
    %cst_29 = arith.constant dense<0.000000e+00> : vector<8x128xf32>
    %146 = tpu.matmul %42, %141, %cst_29 {dimension_numbers = #tpu.dot_dimension_numbers<[1], [0], [0], [1], [0, 0, 1, 1], [], []>} : vector<8x32xf32>, vector<32x128xf32>, vector<8x128xf32> -> vector<8x128xf32>
    %147 = vector.broadcast %143 : vector<1x128xf32> to vector<8x128xf32>
    %148 = arith.addf %146, %147 : vector<8x128xf32>
    %cst_30 = arith.constant dense<0.000000e+00> : vector<8x128xf32>
    %149 = tpu.matmul %144, %142, %cst_30 {dimension_numbers = #tpu.dot_dimension_numbers<[1], [0], [0], [1], [0, 0, 1, 1], [], []>} : vector<8x32xf32>, vector<32x128xf32>, vector<8x128xf32> -> vector<8x128xf32>
    %150 = arith.addf %148, %149 : vector<8x128xf32>
    %151 = math.tanh %150 : vector<8x128xf32>
    %152 = arith.mulf %151, %8 : vector<8x128xf32>
    %153 = arith.addf %152, %11 : vector<8x128xf32>
    %154 = vector.extract_strided_slice %153 {offsets = [0, 0], sizes = [8, 32], strides = [1, 1]} : vector<8x128xf32> to vector<8x32xf32>
    %155 = vector.extract_strided_slice %153 {offsets = [0, 32], sizes = [8, 32], strides = [1, 1]} : vector<8x128xf32> to vector<8x32xf32>
    %156 = vector.extract_strided_slice %153 {offsets = [0, 64], sizes = [8, 32], strides = [1, 1]} : vector<8x128xf32> to vector<8x32xf32>
    %157 = vector.extract_strided_slice %153 {offsets = [0, 96], sizes = [8, 32], strides = [1, 1]} : vector<8x128xf32> to vector<8x32xf32>
    %158 = arith.mulf %155, %145 : vector<8x32xf32>
    %159 = arith.mulf %154, %156 : vector<8x32xf32>
    %160 = arith.addf %158, %159 : vector<8x32xf32>
    %161 = math.tanh %160 : vector<8x32xf32>
    %162 = arith.mulf %157, %161 : vector<8x32xf32>
    %cst_31 = arith.constant dense<0.000000e+00> : vector<8x128xf32>
    %163 = tpu.matmul %56, %141, %cst_31 {dimension_numbers = #tpu.dot_dimension_numbers<[1], [0], [0], [1], [0, 0, 1, 1], [], []>} : vector<8x32xf32>, vector<32x128xf32>, vector<8x128xf32> -> vector<8x128xf32>
    %164 = vector.broadcast %143 : vector<1x128xf32> to vector<8x128xf32>
    %165 = arith.addf %163, %164 : vector<8x128xf32>
    %cst_32 = arith.constant dense<0.000000e+00> : vector<8x128xf32>
    %166 = tpu.matmul %162, %142, %cst_32 {dimension_numbers = #tpu.dot_dimension_numbers<[1], [0], [0], [1], [0, 0, 1, 1], [], []>} : vector<8x32xf32>, vector<32x128xf32>, vector<8x128xf32> -> vector<8x128xf32>
    %167 = arith.addf %165, %166 : vector<8x128xf32>
    %168 = math.tanh %167 : vector<8x128xf32>
    %169 = arith.mulf %168, %8 : vector<8x128xf32>
    %170 = arith.addf %169, %11 : vector<8x128xf32>
    %171 = vector.extract_strided_slice %170 {offsets = [0, 0], sizes = [8, 32], strides = [1, 1]} : vector<8x128xf32> to vector<8x32xf32>
    %172 = vector.extract_strided_slice %170 {offsets = [0, 32], sizes = [8, 32], strides = [1, 1]} : vector<8x128xf32> to vector<8x32xf32>
    %173 = vector.extract_strided_slice %170 {offsets = [0, 64], sizes = [8, 32], strides = [1, 1]} : vector<8x128xf32> to vector<8x32xf32>
    %174 = vector.extract_strided_slice %170 {offsets = [0, 96], sizes = [8, 32], strides = [1, 1]} : vector<8x128xf32> to vector<8x32xf32>
    %175 = arith.mulf %172, %160 : vector<8x32xf32>
    %176 = arith.mulf %171, %173 : vector<8x32xf32>
    %177 = arith.addf %175, %176 : vector<8x32xf32>
    %178 = math.tanh %177 : vector<8x32xf32>
    %179 = arith.mulf %174, %178 : vector<8x32xf32>
    %cst_33 = arith.constant dense<0.000000e+00> : vector<8x128xf32>
    %180 = tpu.matmul %70, %141, %cst_33 {dimension_numbers = #tpu.dot_dimension_numbers<[1], [0], [0], [1], [0, 0, 1, 1], [], []>} : vector<8x32xf32>, vector<32x128xf32>, vector<8x128xf32> -> vector<8x128xf32>
    %181 = vector.broadcast %143 : vector<1x128xf32> to vector<8x128xf32>
    %182 = arith.addf %180, %181 : vector<8x128xf32>
    %cst_34 = arith.constant dense<0.000000e+00> : vector<8x128xf32>
    %183 = tpu.matmul %179, %142, %cst_34 {dimension_numbers = #tpu.dot_dimension_numbers<[1], [0], [0], [1], [0, 0, 1, 1], [], []>} : vector<8x32xf32>, vector<32x128xf32>, vector<8x128xf32> -> vector<8x128xf32>
    %184 = arith.addf %182, %183 : vector<8x128xf32>
    %185 = math.tanh %184 : vector<8x128xf32>
    %186 = arith.mulf %185, %8 : vector<8x128xf32>
    %187 = arith.addf %186, %11 : vector<8x128xf32>
    %188 = vector.extract_strided_slice %187 {offsets = [0, 0], sizes = [8, 32], strides = [1, 1]} : vector<8x128xf32> to vector<8x32xf32>
    %189 = vector.extract_strided_slice %187 {offsets = [0, 32], sizes = [8, 32], strides = [1, 1]} : vector<8x128xf32> to vector<8x32xf32>
    %190 = vector.extract_strided_slice %187 {offsets = [0, 64], sizes = [8, 32], strides = [1, 1]} : vector<8x128xf32> to vector<8x32xf32>
    %191 = vector.extract_strided_slice %187 {offsets = [0, 96], sizes = [8, 32], strides = [1, 1]} : vector<8x128xf32> to vector<8x32xf32>
    %192 = arith.mulf %189, %177 : vector<8x32xf32>
    %193 = arith.mulf %188, %190 : vector<8x32xf32>
    %194 = arith.addf %192, %193 : vector<8x32xf32>
    %195 = math.tanh %194 : vector<8x32xf32>
    %196 = arith.mulf %191, %195 : vector<8x32xf32>
    %cst_35 = arith.constant dense<0.000000e+00> : vector<8x128xf32>
    %197 = tpu.matmul %84, %141, %cst_35 {dimension_numbers = #tpu.dot_dimension_numbers<[1], [0], [0], [1], [0, 0, 1, 1], [], []>} : vector<8x32xf32>, vector<32x128xf32>, vector<8x128xf32> -> vector<8x128xf32>
    %198 = vector.broadcast %143 : vector<1x128xf32> to vector<8x128xf32>
    %199 = arith.addf %197, %198 : vector<8x128xf32>
    %cst_36 = arith.constant dense<0.000000e+00> : vector<8x128xf32>
    %200 = tpu.matmul %196, %142, %cst_36 {dimension_numbers = #tpu.dot_dimension_numbers<[1], [0], [0], [1], [0, 0, 1, 1], [], []>} : vector<8x32xf32>, vector<32x128xf32>, vector<8x128xf32> -> vector<8x128xf32>
    %201 = arith.addf %199, %200 : vector<8x128xf32>
    %202 = math.tanh %201 : vector<8x128xf32>
    %203 = arith.mulf %202, %8 : vector<8x128xf32>
    %204 = arith.addf %203, %11 : vector<8x128xf32>
    %205 = vector.extract_strided_slice %204 {offsets = [0, 0], sizes = [8, 32], strides = [1, 1]} : vector<8x128xf32> to vector<8x32xf32>
    %206 = vector.extract_strided_slice %204 {offsets = [0, 32], sizes = [8, 32], strides = [1, 1]} : vector<8x128xf32> to vector<8x32xf32>
    %207 = vector.extract_strided_slice %204 {offsets = [0, 64], sizes = [8, 32], strides = [1, 1]} : vector<8x128xf32> to vector<8x32xf32>
    %208 = vector.extract_strided_slice %204 {offsets = [0, 96], sizes = [8, 32], strides = [1, 1]} : vector<8x128xf32> to vector<8x32xf32>
    %209 = arith.mulf %206, %194 : vector<8x32xf32>
    %210 = arith.mulf %205, %207 : vector<8x32xf32>
    %211 = arith.addf %209, %210 : vector<8x32xf32>
    %212 = math.tanh %211 : vector<8x32xf32>
    %213 = arith.mulf %208, %212 : vector<8x32xf32>
    %cst_37 = arith.constant dense<0.000000e+00> : vector<8x128xf32>
    %214 = tpu.matmul %98, %141, %cst_37 {dimension_numbers = #tpu.dot_dimension_numbers<[1], [0], [0], [1], [0, 0, 1, 1], [], []>} : vector<8x32xf32>, vector<32x128xf32>, vector<8x128xf32> -> vector<8x128xf32>
    %215 = vector.broadcast %143 : vector<1x128xf32> to vector<8x128xf32>
    %216 = arith.addf %214, %215 : vector<8x128xf32>
    %cst_38 = arith.constant dense<0.000000e+00> : vector<8x128xf32>
    %217 = tpu.matmul %213, %142, %cst_38 {dimension_numbers = #tpu.dot_dimension_numbers<[1], [0], [0], [1], [0, 0, 1, 1], [], []>} : vector<8x32xf32>, vector<32x128xf32>, vector<8x128xf32> -> vector<8x128xf32>
    %218 = arith.addf %216, %217 : vector<8x128xf32>
    %219 = math.tanh %218 : vector<8x128xf32>
    %220 = arith.mulf %219, %8 : vector<8x128xf32>
    %221 = arith.addf %220, %11 : vector<8x128xf32>
    %222 = vector.extract_strided_slice %221 {offsets = [0, 0], sizes = [8, 32], strides = [1, 1]} : vector<8x128xf32> to vector<8x32xf32>
    %223 = vector.extract_strided_slice %221 {offsets = [0, 32], sizes = [8, 32], strides = [1, 1]} : vector<8x128xf32> to vector<8x32xf32>
    %224 = vector.extract_strided_slice %221 {offsets = [0, 64], sizes = [8, 32], strides = [1, 1]} : vector<8x128xf32> to vector<8x32xf32>
    %225 = vector.extract_strided_slice %221 {offsets = [0, 96], sizes = [8, 32], strides = [1, 1]} : vector<8x128xf32> to vector<8x32xf32>
    %226 = arith.mulf %223, %211 : vector<8x32xf32>
    %227 = arith.mulf %222, %224 : vector<8x32xf32>
    %228 = arith.addf %226, %227 : vector<8x32xf32>
    %229 = math.tanh %228 : vector<8x32xf32>
    %230 = arith.mulf %225, %229 : vector<8x32xf32>
    %cst_39 = arith.constant dense<0.000000e+00> : vector<8x128xf32>
    %231 = tpu.matmul %112, %141, %cst_39 {dimension_numbers = #tpu.dot_dimension_numbers<[1], [0], [0], [1], [0, 0, 1, 1], [], []>} : vector<8x32xf32>, vector<32x128xf32>, vector<8x128xf32> -> vector<8x128xf32>
    %232 = vector.broadcast %143 : vector<1x128xf32> to vector<8x128xf32>
    %233 = arith.addf %231, %232 : vector<8x128xf32>
    %cst_40 = arith.constant dense<0.000000e+00> : vector<8x128xf32>
    %234 = tpu.matmul %230, %142, %cst_40 {dimension_numbers = #tpu.dot_dimension_numbers<[1], [0], [0], [1], [0, 0, 1, 1], [], []>} : vector<8x32xf32>, vector<32x128xf32>, vector<8x128xf32> -> vector<8x128xf32>
    %235 = arith.addf %233, %234 : vector<8x128xf32>
    %236 = math.tanh %235 : vector<8x128xf32>
    %237 = arith.mulf %236, %8 : vector<8x128xf32>
    %238 = arith.addf %237, %11 : vector<8x128xf32>
    %239 = vector.extract_strided_slice %238 {offsets = [0, 0], sizes = [8, 32], strides = [1, 1]} : vector<8x128xf32> to vector<8x32xf32>
    %240 = vector.extract_strided_slice %238 {offsets = [0, 32], sizes = [8, 32], strides = [1, 1]} : vector<8x128xf32> to vector<8x32xf32>
    %241 = vector.extract_strided_slice %238 {offsets = [0, 64], sizes = [8, 32], strides = [1, 1]} : vector<8x128xf32> to vector<8x32xf32>
    %242 = vector.extract_strided_slice %238 {offsets = [0, 96], sizes = [8, 32], strides = [1, 1]} : vector<8x128xf32> to vector<8x32xf32>
    %243 = arith.mulf %240, %228 : vector<8x32xf32>
    %244 = arith.mulf %239, %241 : vector<8x32xf32>
    %245 = arith.addf %243, %244 : vector<8x32xf32>
    %246 = math.tanh %245 : vector<8x32xf32>
    %247 = arith.mulf %242, %246 : vector<8x32xf32>
    %cst_41 = arith.constant dense<0.000000e+00> : vector<8x128xf32>
    %248 = tpu.matmul %126, %141, %cst_41 {dimension_numbers = #tpu.dot_dimension_numbers<[1], [0], [0], [1], [0, 0, 1, 1], [], []>} : vector<8x32xf32>, vector<32x128xf32>, vector<8x128xf32> -> vector<8x128xf32>
    %249 = vector.broadcast %143 : vector<1x128xf32> to vector<8x128xf32>
    %250 = arith.addf %248, %249 : vector<8x128xf32>
    %cst_42 = arith.constant dense<0.000000e+00> : vector<8x128xf32>
    %251 = tpu.matmul %247, %142, %cst_42 {dimension_numbers = #tpu.dot_dimension_numbers<[1], [0], [0], [1], [0, 0, 1, 1], [], []>} : vector<8x32xf32>, vector<32x128xf32>, vector<8x128xf32> -> vector<8x128xf32>
    %252 = arith.addf %250, %251 : vector<8x128xf32>
    %253 = math.tanh %252 : vector<8x128xf32>
    %254 = arith.mulf %253, %8 : vector<8x128xf32>
    %255 = arith.addf %254, %11 : vector<8x128xf32>
    %256 = vector.extract_strided_slice %255 {offsets = [0, 0], sizes = [8, 32], strides = [1, 1]} : vector<8x128xf32> to vector<8x32xf32>
    %257 = vector.extract_strided_slice %255 {offsets = [0, 32], sizes = [8, 32], strides = [1, 1]} : vector<8x128xf32> to vector<8x32xf32>
    %258 = vector.extract_strided_slice %255 {offsets = [0, 64], sizes = [8, 32], strides = [1, 1]} : vector<8x128xf32> to vector<8x32xf32>
    %259 = vector.extract_strided_slice %255 {offsets = [0, 96], sizes = [8, 32], strides = [1, 1]} : vector<8x128xf32> to vector<8x32xf32>
    %260 = arith.mulf %257, %245 : vector<8x32xf32>
    %261 = arith.mulf %256, %258 : vector<8x32xf32>
    %262 = arith.addf %260, %261 : vector<8x32xf32>
    %263 = math.tanh %262 : vector<8x32xf32>
    %264 = arith.mulf %259, %263 : vector<8x32xf32>
    %cst_43 = arith.constant dense<0.000000e+00> : vector<8x128xf32>
    %265 = tpu.matmul %140, %141, %cst_43 {dimension_numbers = #tpu.dot_dimension_numbers<[1], [0], [0], [1], [0, 0, 1, 1], [], []>} : vector<8x32xf32>, vector<32x128xf32>, vector<8x128xf32> -> vector<8x128xf32>
    %266 = vector.broadcast %143 : vector<1x128xf32> to vector<8x128xf32>
    %267 = arith.addf %265, %266 : vector<8x128xf32>
    %cst_44 = arith.constant dense<0.000000e+00> : vector<8x128xf32>
    %268 = tpu.matmul %264, %142, %cst_44 {dimension_numbers = #tpu.dot_dimension_numbers<[1], [0], [0], [1], [0, 0, 1, 1], [], []>} : vector<8x32xf32>, vector<32x128xf32>, vector<8x128xf32> -> vector<8x128xf32>
    %269 = arith.addf %267, %268 : vector<8x128xf32>
    %270 = math.tanh %269 : vector<8x128xf32>
    %271 = arith.mulf %270, %8 : vector<8x128xf32>
    %272 = arith.addf %271, %11 : vector<8x128xf32>
    %273 = vector.extract_strided_slice %272 {offsets = [0, 0], sizes = [8, 32], strides = [1, 1]} : vector<8x128xf32> to vector<8x32xf32>
    %274 = vector.extract_strided_slice %272 {offsets = [0, 32], sizes = [8, 32], strides = [1, 1]} : vector<8x128xf32> to vector<8x32xf32>
    %275 = vector.extract_strided_slice %272 {offsets = [0, 64], sizes = [8, 32], strides = [1, 1]} : vector<8x128xf32> to vector<8x32xf32>
    %276 = vector.extract_strided_slice %272 {offsets = [0, 96], sizes = [8, 32], strides = [1, 1]} : vector<8x128xf32> to vector<8x32xf32>
    %277 = arith.mulf %274, %262 : vector<8x32xf32>
    %278 = arith.mulf %273, %275 : vector<8x32xf32>
    %279 = arith.addf %277, %278 : vector<8x32xf32>
    %280 = math.tanh %279 : vector<8x32xf32>
    %281 = arith.mulf %276, %280 : vector<8x32xf32>
    %c0_45 = arith.constant 0 : index
    %c0_46 = arith.constant 0 : index
    %282 = vector.load %arg7[%c0_45, %c0_46] : memref<32x1xf32, #tpu.memory_space<vmem>>, vector<32x1xf32>
    %cst_47 = arith.constant dense<0.000000e+00> : vector<8x1xf32>
    %283 = tpu.matmul %281, %282, %cst_47 {dimension_numbers = #tpu.dot_dimension_numbers<[1], [0], [0], [1], [0, 0, 1, 1], [], []>} : vector<8x32xf32>, vector<32x1xf32>, vector<8x1xf32> -> vector<8x1xf32>
    %c0_48 = arith.constant 0 : index
    %c0_49 = arith.constant 0 : index
    %284 = vector.load %arg8[%c0_48, %c0_49] : memref<1x1xf32, #tpu.memory_space<vmem>>, vector<1x1xf32>
    %285 = vector.broadcast %284 : vector<1x1xf32> to vector<8x1xf32>
    %286 = arith.addf %283, %285 : vector<8x1xf32>
    %c0_50 = arith.constant 0 : index
    %c0_51 = arith.constant 0 : index
    %287 = vector.load %arg9[%c0_50, %c0_51] : memref<8x1xf32, #tpu.memory_space<vmem>>, vector<8x1xf32>
    tpu.vector_store %arg9[%c0_50, %c0_51], %286 {strides = array<i32>} : memref<8x1xf32, #tpu.memory_space<vmem>>, vector<8x1xf32>,
    return
  }
}

</mosaic_0001>

<llo_original>
// kernel: tpu_custom_call.1
$region0: #{tpu_custom_call.1}
  #allocation0 [shape = 'u32[]', space=smem, size = 0x4, offset = 0x4, fixed_abs, tag = 'smem constant byte address 0x4 - core index']
  #allocation1 [shape = 'u32[144,128]{1,0:T(1,128)}', space=vmem, size = 0x12000, scoped, tag = 'internal scratch']
  #allocation2 [shape = 'f32[1,1]{1,0:T(1,128)S(1)}', space=vmem, size = 0x200, scoped, tag = 'scoped memory for tpu_custom_call.1']
  %s0 = inlined_call_operand.vmem [shape: f32[64,8], index: 0, kind: input, shape index: {}]
  %s1 = inlined_call_operand.vmem [shape: f32[8,128], index: 1, kind: input, shape index: {}]
  %s2 = inlined_call_operand.vmem [shape: f32[32,128], index: 2, kind: input, shape index: {}]
  %s3 = inlined_call_operand.vmem [shape: f32[1,128], index: 3, kind: input, shape index: {}]
  %s4 = inlined_call_operand.vmem [shape: f32[32,128], index: 4, kind: input, shape index: {}]
  %s5 = inlined_call_operand.vmem [shape: f32[32,128], index: 5, kind: input, shape index: {}]
  %s6 = inlined_call_operand.vmem [shape: f32[1,128], index: 6, kind: input, shape index: {}]
  %s7 = inlined_call_operand.vmem [shape: f32[32,1], index: 7, kind: input, shape index: {}]
  %s8 = inlined_call_operand.<no memory space> [shape: f32[1,1], index: 8, kind: input, shape index: {}]
  %s9 = inlined_call_operand.vmem [shape: f32[8,1], index: 9, kind: output, shape index: {}]
  %s10 = sld [smem:[#allocation0]]
  $region46: #{tpu_custom_call.1} parent=0
    _
  %s12 = ssub.s32 1, %s10
  %s13 = scalar_select 0, %s12, %s10
  %v14 = vstv %s8
  %15 = vst [vmem:[#allocation2] sm:$0x1] %v14
  // Predicated region
  $region2: #{tpu_custom_call.1} parent=0 // pred_check
    _
  $region3: #{tpu_custom_call.1} parent=0 // pred_check_branch
    %17 = sbr.rel (0) target = $region5
  $region4: #{tpu_custom_call.1} parent=0 // pred_region
    _
  $region5: #{tpu_custom_call.1} parent=0 // pred_fallthru
    _
  // Predicated region
  $region6: #{tpu_custom_call.1} parent=0 // pred_check
    _
  $region7: #{tpu_custom_call.1} parent=0 // pred_check_branch
    %19 = sbr.rel (0) target = $region9
  $region8: #{tpu_custom_call.1} parent=0 // pred_region
    _
  $region9: #{tpu_custom_call.1} parent=0 // pred_fallthru
    _
  // Predicated region
  $region10: #{tpu_custom_call.1} parent=0 // pred_check
    _
  $region11: #{tpu_custom_call.1} parent=0 // pred_check_branch
    %21 = sbr.rel (0) target = $region13
  $region12: #{tpu_custom_call.1} parent=0 // pred_region
    _
  $region13: #{tpu_custom_call.1} parent=0 // pred_fallthru
    _
  // Predicated region
  $region14: #{tpu_custom_call.1} parent=0 // pred_check
    _
  $region15: #{tpu_custom_call.1} parent=0 // pred_check_branch
    %23 = sbr.rel (0) target = $region17
  $region16: #{tpu_custom_call.1} parent=0 // pred_region
    _
  $region17: #{tpu_custom_call.1} parent=0 // pred_fallthru
    _
  // Predicated region
  $region18: #{tpu_custom_call.1} parent=0 // pred_check
    _
  $region19: #{tpu_custom_call.1} parent=0 // pred_check_branch
    %25 = sbr.rel (0) target = $region21
  $region20: #{tpu_custom_call.1} parent=0 // pred_region
    _
  $region21: #{tpu_custom_call.1} parent=0 // pred_fallthru
    _
  // Predicated region
  $region22: #{tpu_custom_call.1} parent=0 // pred_check
    _
  $region23: #{tpu_custom_call.1} parent=0 // pred_check_branch
    %27 = sbr.rel (0) target = $region25
  $region24: #{tpu_custom_call.1} parent=0 // pred_region
    _
  $region25: #{tpu_custom_call.1} parent=0 // pred_fallthru
    _
  // Predicated region
  $region26: #{tpu_custom_call.1} parent=0 // pred_check
    _
  $region27: #{tpu_custom_call.1} parent=0 // pred_check_branch
    %29 = sbr.rel (0) target = $region29
  $region28: #{tpu_custom_call.1} parent=0 // pred_region
    _
  $region29: #{tpu_custom_call.1} parent=0 // pred_fallthru
    _
  // Predicated region
  $region30: #{tpu_custom_call.1} parent=0 // pred_check
    _
  $region31: #{tpu_custom_call.1} parent=0 // pred_check_branch
    %31 = sbr.rel (0) target = $region33
  $region32: #{tpu_custom_call.1} parent=0 // pred_region
    _
  $region33: #{tpu_custom_call.1} parent=0 // pred_fallthru
    _
  // Predicated region
  $region34: #{tpu_custom_call.1} parent=0 // pred_check
    _
  $region35: #{tpu_custom_call.1} parent=0 // pred_check_branch
    %33 = sbr.rel (0) target = $region37
  $region36: #{tpu_custom_call.1} parent=0 // pred_region
    _
  $region37: #{tpu_custom_call.1} parent=0 // pred_fallthru
    _
  %v34 = vlaneseq
  %v35 = vand.u32 %v34, 127
  %vm36 = vcmp.ge.s32.totalorder %v35, 64
  %vm37 = vcmp.lt.s32.totalorder %v35, 96
  %vm38 = vmand %vm36, %vm37
  %v39 = vsel %vm38, 1.0, 0.5
  %v40 = vsel %vm38, 0.0, 0.5
  %v41 = vld [vmem:[%s0] sm:$0xff]
  %v42 = vld [vmem:[%s0 + $0x8] sm:$0xff]
  %v43 = vld [vmem:[%s0 + $0x10] sm:$0xff]
  %v44 = vld [vmem:[%s0 + $0x18] sm:$0xff]
  %v45 = vld [vmem:[%s0 + $0x20] sm:$0xff]
  %v46 = vld [vmem:[%s0 + $0x28] sm:$0xff]
  %v47 = vld [vmem:[%s0 + $0x30] sm:$0xff]
  %v48 = vld [vmem:[%s0 + $0x38] sm:$0xff]
  %v49 = vld [vmem:[%s1] sm:$0xff]
  %v50 = vld [vmem:[%s2] sm:$0xff]
  %v51 = vld [vmem:[%s2 + $0x8] sm:$0xff]
  %v52 = vld [vmem:[%s2 + $0x10] sm:$0xff]
  %v53 = vld [vmem:[%s2 + $0x18] sm:$0xff]
  %v54 = vld [vmem:[%s3] sm:$0x1]
  %v56 = vlaneseq
  %v57 = vshrl.u32 %v56, 7
  %v58 = vsub.s32 0, %v57
  %v59 = vrot.slane %v54, %v58
  %vm61 = vcmask 64512
  %v63 = vsel %vm61, %v41, 0
  %v66 = vsel %vm61, %v42, 0
  %v69 = vsel %vm61, %v43, 0
  %v72 = vsel %vm61, %v44, 0
  %v75 = vsel %vm61, %v45, 0
  %v78 = vsel %vm61, %v46, 0
  %v81 = vsel %vm61, %v47, 0
  %v84 = vsel %vm61, %v48, 0
  %86 = vmatprep.subr.mxu0 0.0
  %87 = vmatpush1.msra.mxu0 %v49
  %88 = vmatprep.subr.mxu0 0.0
  %89 = vmatpush1.msra.mxu0 0.0
  %90 = vmatprep.subr.mxu0 0.0
  %91 = vmatpush1.msra.mxu0 0.0
  %92 = vmatprep.subr.mxu0 0.0
  %93 = vmatpush1.msra.mxu0 0.0
  %94 = vmatprep.subr.mxu0 0.0
  %95 = vmatpush1.msra.mxu0 0.0
  %96 = vmatprep.subr.mxu0 0.0
  %97 = vmatpush1.msra.mxu0 0.0
  %98 = vmatprep.subr.mxu0 0.0
  %99 = vmatpush1.msra.mxu0 0.0
  %100 = vmatprep.subr.mxu0 0.0
  %101 = vmatpush1.msra.mxu0 0.0
  %102 = vmatprep.subr.mxu0 0.0
  %103 = vmatpush1.msra.mxu0 0.0
  %104 = vmatprep.subr.mxu0 0.0
  %105 = vmatpush1.msra.mxu0 0.0
  %106 = vmatprep.subr.mxu0 0.0
  %107 = vmatpush1.msra.mxu0 0.0
  %108 = vmatprep.subr.mxu0 0.0
  %109 = vmatpush1.msra.mxu0 0.0
  %110 = vmatprep.subr.mxu0 0.0
  %111 = vmatpush1.msra.mxu0 0.0
  %112 = vmatprep.subr.mxu0 0.0
  %113 = vmatpush1.msra.mxu0 0.0
  %114 = vmatprep.subr.mxu0 0.0
  %115 = vmatpush1.msra.mxu0 0.0
  %116 = vmatprep.subr.mxu0 0.0
  %117 = vmatpush1.msra.mxu0 0.0
  %118 = vmatprep.subr.mxu0 0.0
  %119 = vmatpush1.msra.mxu0 0.0
  %120 = vmatprep.subr.mxu0 0.0
  %121 = vmatpush1.msra.mxu0 0.0
  %122 = vmatprep.subr.mxu0 0.0
  %123 = vmatpush1.msra.mxu0 0.0
  %124 = vmatprep.subr.mxu0 0.0
  %125 = vmatpush1.msra.mxu0 0.0
  %126 = vmatprep.subr.mxu0 0.0
  %127 = vmatpush1.msra.mxu0 0.0
  %128 = vmatprep.subr.mxu0 0.0
  %129 = vmatpush1.msra.mxu0 0.0
  %130 = vmatprep.subr.mxu0 0.0
  %131 = vmatpush1.msra.mxu0 0.0
  %132 = vmatprep.subr.mxu0 0.0
  %133 = vmatpush1.msra.mxu0 0.0
  %134 = vmatprep.subr.mxu0 0.0
  %135 = vmatpush1.msra.mxu0 0.0
  %136 = vmatprep.subr.mxu0 0.0
  %137 = vmatpush1.msra.mxu0 0.0
  %138 = vmatprep.subr.mxu0 0.0
  %139 = vmatpush1.msra.mxu0 0.0
  %140 = vmatprep.subr.mxu0 0.0
  %141 = vmatpush1.msra.mxu0 0.0
  %142 = vmatprep.subr.mxu0 0.0
  %143 = vmatpush1.msra.mxu0 0.0
  %144 = vmatprep.subr.mxu0 0.0
  %145 = vmatpush1.msra.mxu0 0.0
  %146 = vmatprep.subr.mxu0 0.0
  %147 = vmatpush1.msra.mxu0 0.0
  %148 = vmatprep.subr.mxu0 0.0
  %149 = vmatpush1.msra.mxu0 0.0
  %150 = vmatprep.mubr.f32.mxu0 0.0
  %151 = vmatmul.mubr.f32.gmra.mrb[0].mxu0 %v63
  %v152 = vpop.f32.mrb[0].mxu0
  %v153 = vadd.f32 %v59, %v152
  %v154 = vpop.f32.mrb[0].mxu0
  %155 = vmatprep.mubr.f32.mxu0 0.0
  %156 = vmatmul.mubr.f32.gmra.mrb[0].mxu0 %v66
  %v157 = vpop.f32.mrb[0].mxu0
  %v158 = vadd.f32 %v59, %v157
  %v159 = vpop.f32.mrb[0].mxu0
  %160 = vmatprep.mubr.f32.mxu0 0.0
  %161 = vmatmul.mubr.f32.gmra.mrb[0].mxu0 %v69
  %v162 = vpop.f32.mrb[0].mxu0
  %v163 = vadd.f32 %v59, %v162
  %v164 = vpop.f32.mrb[0].mxu0
  %165 = vmatprep.mubr.f32.mxu0 0.0
  %166 = vmatmul.mubr.f32.gmra.mrb[0].mxu0 %v72
  %v167 = vpop.f32.mrb[0].mxu0
  %v168 = vadd.f32 %v59, %v167
  %v169 = vpop.f32.mrb[0].mxu0
  %170 = vmatprep.mubr.f32.mxu0 0.0
  %171 = vmatmul.mubr.f32.gmra.mrb[0].mxu0 %v75
  %v172 = vpop.f32.mrb[0].mxu0
  %v173 = vadd.f32 %v59, %v172
  %v174 = vpop.f32.mrb[0].mxu0
  %175 = vmatprep.mubr.f32.mxu0 0.0
  %176 = vmatmul.mubr.f32.gmra.mrb[0].mxu0 %v78
  %v177 = vpop.f32.mrb[0].mxu0
  %v178 = vadd.f32 %v59, %v177
  %v179 = vpop.f32.mrb[0].mxu0
  %180 = vmatprep.mubr.f32.mxu0 0.0
  %181 = vmatmul.mubr.f32.gmra.mrb[0].mxu0 %v81
  %v182 = vpop.f32.mrb[0].mxu0
  %v183 = vadd.f32 %v59, %v182
  %v184 = vpop.f32.mrb[0].mxu0
  %185 = vmatprep.mubr.f32.mxu0 0.0
  %186 = vmatmul.mubr.f32.gmra.mrb[0].mxu0 %v84
  %v187 = vpop.f32.mrb[0].mxu0
  %v188 = vadd.f32 %v59, %v187
  %v189 = vpop.f32.mrb[0].mxu0
  %190 = vdwg.mxu0
  %vm191 = vcmask 261120
  %v193 = vsel %vm191, 0.0, 0
  %195 = vmatprep.subr.mxu0 0.0
  %196 = vmatpush1.msra.mxu0 %v50
  %197 = vmatprep.subr.mxu0 0.0
  %198 = vmatpush1.msra.mxu0 %v51
  %199 = vmatprep.subr.mxu0 0.0
  %200 = vmatpush1.msra.mxu0 %v52
  %201 = vmatprep.subr.mxu0 0.0
  %202 = vmatpush1.msra.mxu0 %v53
  %203 = vmatprep.subr.mxu0 0.0
  %204 = vmatpush1.msra.mxu0 0.0
  %205 = vmatprep.subr.mxu0 0.0
  %206 = vmatpush1.msra.mxu0 0.0
  %207 = vmatprep.subr.mxu0 0.0
  %208 = vmatpush1.msra.mxu0 0.0
  %209 = vmatprep.subr.mxu0 0.0
  %210 = vmatpush1.msra.mxu0 0.0
  %211 = vmatprep.subr.mxu0 0.0
  %212 = vmatpush1.msra.mxu0 0.0
  %213 = vmatprep.subr.mxu0 0.0
  %214 = vmatpush1.msra.mxu0 0.0
  %215 = vmatprep.subr.mxu0 0.0
  %216 = vmatpush1.msra.mxu0 0.0
  %217 = vmatprep.subr.mxu0 0.0
  %218 = vmatpush1.msra.mxu0 0.0
  %219 = vmatprep.subr.mxu0 0.0
  %220 = vmatpush1.msra.mxu0 0.0
  %221 = vmatprep.subr.mxu0 0.0
  %222 = vmatpush1.msra.mxu0 0.0
  %223 = vmatprep.subr.mxu0 0.0
  %224 = vmatpush1.msra.mxu0 0.0
  %225 = vmatprep.subr.mxu0 0.0
  %226 = vmatpush1.msra.mxu0 0.0
  %227 = vmatprep.subr.mxu0 0.0
  %228 = vmatpush1.msra.mxu0 0.0
  %229 = vmatprep.subr.mxu0 0.0
  %230 = vmatpush1.msra.mxu0 0.0
  %231 = vmatprep.subr.mxu0 0.0
  %232 = vmatpush1.msra.mxu0 0.0
  %233 = vmatprep.subr.mxu0 0.0
  %234 = vmatpush1.msra.mxu0 0.0
  %235 = vmatprep.subr.mxu0 0.0
  %236 = vmatpush1.msra.mxu0 0.0
  %237 = vmatprep.subr.mxu0 0.0
  %238 = vmatpush1.msra.mxu0 0.0
  %239 = vmatprep.subr.mxu0 0.0
  %240 = vmatpush1.msra.mxu0 0.0
  %241 = vmatprep.subr.mxu0 0.0
  %242 = vmatpush1.msra.mxu0 0.0
  %243 = vmatprep.subr.mxu0 0.0
  %244 = vmatpush1.msra.mxu0 0.0
  %245 = vmatprep.subr.mxu0 0.0
  %246 = vmatpush1.msra.mxu0 0.0
  %247 = vmatprep.subr.mxu0 0.0
  %248 = vmatpush1.msra.mxu0 0.0
  %249 = vmatprep.subr.mxu0 0.0
  %250 = vmatpush1.msra.mxu0 0.0
  %251 = vmatprep.subr.mxu0 0.0
  %252 = vmatpush1.msra.mxu0 0.0
  %253 = vmatprep.subr.mxu0 0.0
  %254 = vmatpush1.msra.mxu0 0.0
  %255 = vmatprep.subr.mxu0 0.0
  %256 = vmatpush1.msra.mxu0 0.0
  %257 = vmatprep.subr.mxu0 0.0
  %258 = vmatpush1.msra.mxu0 0.0
  %259 = vmatprep.mubr.f32.mxu0 0.0
  %260 = vmatmul.mubr.f32.gmra.mrb[0].mxu0 %v193
  %v261 = vpop.f32.mrb[0].mxu0
  %v262 = vadd.f32 0.0, %v261
  %v263 = vpop.f32.mrb[0].mxu0
  %264 = vdwg.mxu0
  %v265 = vadd.f32 %v153, %v262
  %v266 = vtanh.pop %v265
  %v267 = vmul.f32 %v266, %v39
  %v268 = vadd.f32 %v267, %v40
  %v269 = vmul.f32 %v268, 0.0
  %271 = vrot.lane.b32.xlu0 %v268, 64
  %v272 = vpop.permute.xlu0 %271
  %v274 = vmul.f32 %v268, %v272
  %276 = vrot.lane.b32.xlu0 %v274, 32
  %v277 = vpop.permute.xlu0 %276
  %v279 = vadd.f32 %v269, %v277
  %v280 = vtanh.pop %v279
  %282 = vrot.lane.b32.xlu0 %v280, 64
  %v283 = vpop.permute.xlu0 %282
  %v285 = vmul.f32 %v268, %v283
  %287 = vrot.lane.b32.xlu0 %v285, 32
  %v288 = vpop.permute.xlu0 %287
  %v289 = vsel %vm191, %v288, 0
  %291 = vmatprep.subr.mxu0 0.0
  %292 = vmatpush1.msra.mxu0 %v50
  %293 = vmatprep.subr.mxu0 0.0
  %294 = vmatpush1.msra.mxu0 %v51
  %295 = vmatprep.subr.mxu0 0.0
  %296 = vmatpush1.msra.mxu0 %v52
  %297 = vmatprep.subr.mxu0 0.0
  %298 = vmatpush1.msra.mxu0 %v53
  %299 = vmatprep.subr.mxu0 0.0
  %300 = vmatpush1.msra.mxu0 0.0
  %301 = vmatprep.subr.mxu0 0.0
  %302 = vmatpush1.msra.mxu0 0.0
  %303 = vmatprep.subr.mxu0 0.0
  %304 = vmatpush1.msra.mxu0 0.0
  %305 = vmatprep.subr.mxu0 0.0
  %306 = vmatpush1.msra.mxu0 0.0
  %307 = vmatprep.subr.mxu0 0.0
  %308 = vmatpush1.msra.mxu0 0.0
  %309 = vmatprep.subr.mxu0 0.0
  %310 = vmatpush1.msra.mxu0 0.0
  %311 = vmatprep.subr.mxu0 0.0
  %312 = vmatpush1.msra.mxu0 0.0
  %313 = vmatprep.subr.mxu0 0.0
  %314 = vmatpush1.msra.mxu0 0.0
  %315 = vmatprep.subr.mxu0 0.0
  %316 = vmatpush1.msra.mxu0 0.0
  %317 = vmatprep.subr.mxu0 0.0
  %318 = vmatpush1.msra.mxu0 0.0
  %319 = vmatprep.subr.mxu0 0.0
  %320 = vmatpush1.msra.mxu0 0.0
  %321 = vmatprep.subr.mxu0 0.0
  %322 = vmatpush1.msra.mxu0 0.0
  %323 = vmatprep.subr.mxu0 0.0
  %324 = vmatpush1.msra.mxu0 0.0
  %325 = vmatprep.subr.mxu0 0.0
  %326 = vmatpush1.msra.mxu0 0.0
  %327 = vmatprep.subr.mxu0 0.0
  %328 = vmatpush1.msra.mxu0 0.0
  %329 = vmatprep.subr.mxu0 0.0
  %330 = vmatpush1.msra.mxu0 0.0
  %331 = vmatprep.subr.mxu0 0.0
  %332 = vmatpush1.msra.mxu0 0.0
  %333 = vmatprep.subr.mxu0 0.0
  %334 = vmatpush1.msra.mxu0 0.0
  %335 = vmatprep.subr.mxu0 0.0
  %336 = vmatpush1.msra.mxu0 0.0
  %337 = vmatprep.subr.mxu0 0.0
  %338 = vmatpush1.msra.mxu0 0.0
  %339 = vmatprep.subr.mxu0 0.0
  %340 = vmatpush1.msra.mxu0 0.0
  %341 = vmatprep.subr.mxu0 0.0
  %342 = vmatpush1.msra.mxu0 0.0
  %343 = vmatprep.subr.mxu0 0.0
  %344 = vmatpush1.msra.mxu0 0.0
  %345 = vmatprep.subr.mxu0 0.0
  %346 = vmatpush1.msra.mxu0 0.0
  %347 = vmatprep.subr.mxu0 0.0
  %348 = vmatpush1.msra.mxu0 0.0
  %349 = vmatprep.subr.mxu0 0.0
  %350 = vmatpush1.msra.mxu0 0.0
  %351 = vmatprep.subr.mxu0 0.0
  %352 = vmatpush1.msra.mxu0 0.0
  %353 = vmatprep.subr.mxu0 0.0
  %354 = vmatpush1.msra.mxu0 0.0
  %355 = vmatprep.mubr.f32.mxu0 0.0
  %356 = vmatmul.mubr.f32.gmra.mrb[0].mxu0 %v289
  %v357 = vpop.f32.mrb[0].mxu0
  %v358 = vadd.f32 0.0, %v357
  %v359 = vpop.f32.mrb[0].mxu0
  %360 = vdwg.mxu0
  %v361 = vadd.f32 %v158, %v358
  %v362 = vtanh.pop %v361
  %v363 = vmul.f32 %v362, %v39
  %v364 = vadd.f32 %v363, %v40
  %v365 = vmul.f32 %v364, %v279
  %367 = vrot.lane.b32.xlu0 %v364, 64
  %v368 = vpop.permute.xlu0 %367
  %v370 = vmul.f32 %v364, %v368
  %372 = vrot.lane.b32.xlu0 %v370, 32
  %v373 = vpop.permute.xlu0 %372
  %v375 = vadd.f32 %v365, %v373
  %v376 = vtanh.pop %v375
  %378 = vrot.lane.b32.xlu0 %v376, 64
  %v379 = vpop.permute.xlu0 %378
  %v381 = vmul.f32 %v364, %v379
  %383 = vrot.lane.b32.xlu0 %v381, 32
  %v384 = vpop.permute.xlu0 %383
  %v385 = vsel %vm191, %v384, 0
  %387 = vmatprep.subr.mxu0 0.0
  %388 = vmatpush1.msra.mxu0 %v50
  %389 = vmatprep.subr.mxu0 0.0
  %390 = vmatpush1.msra.mxu0 %v51
  %391 = vmatprep.subr.mxu0 0.0
  %392 = vmatpush1.msra.mxu0 %v52
  %393 = vmatprep.subr.mxu0 0.0
  %394 = vmatpush1.msra.mxu0 %v53
  %395 = vmatprep.subr.mxu0 0.0
  %396 = vmatpush1.msra.mxu0 0.0
  %397 = vmatprep.subr.mxu0 0.0
  %398 = vmatpush1.msra.mxu0 0.0
  %399 = vmatprep.subr.mxu0 0.0
  %400 = vmatpush1.msra.mxu0 0.0
  %401 = vmatprep.subr.mxu0 0.0
  %402 = vmatpush1.msra.mxu0 0.0
  %403 = vmatprep.subr.mxu0 0.0
  %404 = vmatpush1.msra.mxu0 0.0
  %405 = vmatprep.subr.mxu0 0.0
  %406 = vmatpush1.msra.mxu0 0.0
  %407 = vmatprep.subr.mxu0 0.0
  %408 = vmatpush1.msra.mxu0 0.0
  %409 = vmatprep.subr.mxu0 0.0
  %410 = vmatpush1.msra.mxu0 0.0
  %411 = vmatprep.subr.mxu0 0.0
  %412 = vmatpush1.msra.mxu0 0.0
  %413 = vmatprep.subr.mxu0 0.0
  %414 = vmatpush1.msra.mxu0 0.0
  %415 = vmatprep.subr.mxu0 0.0
  %416 = vmatpush1.msra.mxu0 0.0
  %417 = vmatprep.subr.mxu0 0.0
  %418 = vmatpush1.msra.mxu0 0.0
  %419 = vmatprep.subr.mxu0 0.0
  %420 = vmatpush1.msra.mxu0 0.0
  %421 = vmatprep.subr.mxu0 0.0
  %422 = vmatpush1.msra.mxu0 0.0
  %423 = vmatprep.subr.mxu0 0.0
  %424 = vmatpush1.msra.mxu0 0.0
  %425 = vmatprep.subr.mxu0 0.0
  %426 = vmatpush1.msra.mxu0 0.0
  %427 = vmatprep.subr.mxu0 0.0
  %428 = vmatpush1.msra.mxu0 0.0
  %429 = vmatprep.subr.mxu0 0.0
  %430 = vmatpush1.msra.mxu0 0.0
  %431 = vmatprep.subr.mxu0 0.0
  %432 = vmatpush1.msra.mxu0 0.0
  %433 = vmatprep.subr.mxu0 0.0
  %434 = vmatpush1.msra.mxu0 0.0
  %435 = vmatprep.subr.mxu0 0.0
  %436 = vmatpush1.msra.mxu0 0.0
  %437 = vmatprep.subr.mxu0 0.0
  %438 = vmatpush1.msra.mxu0 0.0
  %439 = vmatprep.subr.mxu0 0.0
  %440 = vmatpush1.msra.mxu0 0.0
  %441 = vmatprep.subr.mxu0 0.0
  %442 = vmatpush1.msra.mxu0 0.0
  %443 = vmatprep.subr.mxu0 0.0
  %444 = vmatpush1.msra.mxu0 0.0
  %445 = vmatprep.subr.mxu0 0.0
  %446 = vmatpush1.msra.mxu0 0.0
  %447 = vmatprep.subr.mxu0 0.0
  %448 = vmatpush1.msra.mxu0 0.0
  %449 = vmatprep.subr.mxu0 0.0
  %450 = vmatpush1.msra.mxu0 0.0
  %451 = vmatprep.mubr.f32.mxu0 0.0
  %452 = vmatmul.mubr.f32.gmra.mrb[0].mxu0 %v385
  %v453 = vpop.f32.mrb[0].mxu0
  %v454 = vadd.f32 0.0, %v453
  %v455 = vpop.f32.mrb[0].mxu0
  %456 = vdwg.mxu0
  %v457 = vadd.f32 %v163, %v454
  %v458 = vtanh.pop %v457
  %v459 = vmul.f32 %v458, %v39
  %v460 = vadd.f32 %v459, %v40
  %v461 = vmul.f32 %v460, %v375
  %463 = vrot.lane.b32.xlu0 %v460, 64
  %v464 = vpop.permute.xlu0 %463
  %v466 = vmul.f32 %v460, %v464
  %468 = vrot.lane.b32.xlu0 %v466, 32
  %v469 = vpop.permute.xlu0 %468
  %v471 = vadd.f32 %v461, %v469
  %v472 = vtanh.pop %v471
  %474 = vrot.lane.b32.xlu0 %v472, 64
  %v475 = vpop.permute.xlu0 %474
  %v477 = vmul.f32 %v460, %v475
  %479 = vrot.lane.b32.xlu0 %v477, 32
  %v480 = vpop.permute.xlu0 %479
  %v481 = vsel %vm191, %v480, 0
  %483 = vmatprep.subr.mxu0 0.0
  %484 = vmatpush1.msra.mxu0 %v50
  %485 = vmatprep.subr.mxu0 0.0
  %486 = vmatpush1.msra.mxu0 %v51
  %487 = vmatprep.subr.mxu0 0.0
  %488 = vmatpush1.msra.mxu0 %v52
  %489 = vmatprep.subr.mxu0 0.0
  %490 = vmatpush1.msra.mxu0 %v53
  %491 = vmatprep.subr.mxu0 0.0
  %492 = vmatpush1.msra.mxu0 0.0
  %493 = vmatprep.subr.mxu0 0.0
  %494 = vmatpush1.msra.mxu0 0.0
  %495 = vmatprep.subr.mxu0 0.0
  %496 = vmatpush1.msra.mxu0 0.0
  %497 = vmatprep.subr.mxu0 0.0
  %498 = vmatpush1.msra.mxu0 0.0
  %499 = vmatprep.subr.mxu0 0.0
  %500 = vmatpush1.msra.mxu0 0.0
  %501 = vmatprep.subr.mxu0 0.0
  %502 = vmatpush1.msra.mxu0 0.0
  %503 = vmatprep.subr.mxu0 0.0
  %504 = vmatpush1.msra.mxu0 0.0
  %505 = vmatprep.subr.mxu0 0.0
  %506 = vmatpush1.msra.mxu0 0.0
  %507 = vmatprep.subr.mxu0 0.0
  %508 = vmatpush1.msra.mxu0 0.0
  %509 = vmatprep.subr.mxu0 0.0
  %510 = vmatpush1.msra.mxu0 0.0
  %511 = vmatprep.subr.mxu0 0.0
  %512 = vmatpush1.msra.mxu0 0.0
  %513 = vmatprep.subr.mxu0 0.0
  %514 = vmatpush1.msra.mxu0 0.0
  %515 = vmatprep.subr.mxu0 0.0
  %516 = vmatpush1.msra.mxu0 0.0
  %517 = vmatprep.subr.mxu0 0.0
  %518 = vmatpush1.msra.mxu0 0.0
  %519 = vmatprep.subr.mxu0 0.0
  %520 = vmatpush1.msra.mxu0 0.0
  %521 = vmatprep.subr.mxu0 0.0
  %522 = vmatpush1.msra.mxu0 0.0
  %523 = vmatprep.subr.mxu0 0.0
  %524 = vmatpush1.msra.mxu0 0.0
  %525 = vmatprep.subr.mxu0 0.0
  %526 = vmatpush1.msra.mxu0 0.0
  %527 = vmatprep.subr.mxu0 0.0
  %528 = vmatpush1.msra.mxu0 0.0
  %529 = vmatprep.subr.mxu0 0.0
  %530 = vmatpush1.msra.mxu0 0.0
  %531 = vmatprep.subr.mxu0 0.0
  %532 = vmatpush1.msra.mxu0 0.0
  %533 = vmatprep.subr.mxu0 0.0
  %534 = vmatpush1.msra.mxu0 0.0
  %535 = vmatprep.subr.mxu0 0.0
  %536 = vmatpush1.msra.mxu0 0.0
  %537 = vmatprep.subr.mxu0 0.0
  %538 = vmatpush1.msra.mxu0 0.0
  %539 = vmatprep.subr.mxu0 0.0
  %540 = vmatpush1.msra.mxu0 0.0
  %541 = vmatprep.subr.mxu0 0.0
  %542 = vmatpush1.msra.mxu0 0.0
  %543 = vmatprep.subr.mxu0 0.0
  %544 = vmatpush1.msra.mxu0 0.0
  %545 = vmatprep.subr.mxu0 0.0
  %546 = vmatpush1.msra.mxu0 0.0
  %547 = vmatprep.mubr.f32.mxu0 0.0
  %548 = vmatmul.mubr.f32.gmra.mrb[0].mxu0 %v481
  %v549 = vpop.f32.mrb[0].mxu0
  %v550 = vadd.f32 0.0, %v549
  %v551 = vpop.f32.mrb[0].mxu0
  %552 = vdwg.mxu0
  %v553 = vadd.f32 %v168, %v550
  %v554 = vtanh.pop %v553
  %v555 = vmul.f32 %v554, %v39
  %v556 = vadd.f32 %v555, %v40
  %v557 = vmul.f32 %v556, %v471
  %559 = vrot.lane.b32.xlu0 %v556, 64
  %v560 = vpop.permute.xlu0 %559
  %v562 = vmul.f32 %v556, %v560
  %564 = vrot.lane.b32.xlu0 %v562, 32
  %v565 = vpop.permute.xlu0 %564
  %v567 = vadd.f32 %v557, %v565
  %v568 = vtanh.pop %v567
  %570 = vrot.lane.b32.xlu0 %v568, 64
  %v571 = vpop.permute.xlu0 %570
  %v573 = vmul.f32 %v556, %v571
  %575 = vrot.lane.b32.xlu0 %v573, 32
  %v576 = vpop.permute.xlu0 %575
  %v577 = vsel %vm191, %v576, 0
  %579 = vmatprep.subr.mxu0 0.0
  %580 = vmatpush1.msra.mxu0 %v50
  %581 = vmatprep.subr.mxu0 0.0
  %582 = vmatpush1.msra.mxu0 %v51
  %583 = vmatprep.subr.mxu0 0.0
  %584 = vmatpush1.msra.mxu0 %v52
  %585 = vmatprep.subr.mxu0 0.0
  %586 = vmatpush1.msra.mxu0 %v53
  %587 = vmatprep.subr.mxu0 0.0
  %588 = vmatpush1.msra.mxu0 0.0
  %589 = vmatprep.subr.mxu0 0.0
  %590 = vmatpush1.msra.mxu0 0.0
  %591 = vmatprep.subr.mxu0 0.0
  %592 = vmatpush1.msra.mxu0 0.0
  %593 = vmatprep.subr.mxu0 0.0
  %594 = vmatpush1.msra.mxu0 0.0
  %595 = vmatprep.subr.mxu0 0.0
  %596 = vmatpush1.msra.mxu0 0.0
  %597 = vmatprep.subr.mxu0 0.0
  %598 = vmatpush1.msra.mxu0 0.0
  %599 = vmatprep.subr.mxu0 0.0
  %600 = vmatpush1.msra.mxu0 0.0
  %601 = vmatprep.subr.mxu0 0.0
  %602 = vmatpush1.msra.mxu0 0.0
  %603 = vmatprep.subr.mxu0 0.0
  %604 = vmatpush1.msra.mxu0 0.0
  %605 = vmatprep.subr.mxu0 0.0
  %606 = vmatpush1.msra.mxu0 0.0
  %607 = vmatprep.subr.mxu0 0.0
  %608 = vmatpush1.msra.mxu0 0.0
  %609 = vmatprep.subr.mxu0 0.0
  %610 = vmatpush1.msra.mxu0 0.0
  %611 = vmatprep.subr.mxu0 0.0
  %612 = vmatpush1.msra.mxu0 0.0
  %613 = vmatprep.subr.mxu0 0.0
  %614 = vmatpush1.msra.mxu0 0.0
  %615 = vmatprep.subr.mxu0 0.0
  %616 = vmatpush1.msra.mxu0 0.0
  %617 = vmatprep.subr.mxu0 0.0
  %618 = vmatpush1.msra.mxu0 0.0
  %619 = vmatprep.subr.mxu0 0.0
  %620 = vmatpush1.msra.mxu0 0.0
  %621 = vmatprep.subr.mxu0 0.0
  %622 = vmatpush1.msra.mxu0 0.0
  %623 = vmatprep.subr.mxu0 0.0
  %624 = vmatpush1.msra.mxu0 0.0
  %625 = vmatprep.subr.mxu0 0.0
  %626 = vmatpush1.msra.mxu0 0.0
  %627 = vmatprep.subr.mxu0 0.0
  %628 = vmatpush1.msra.mxu0 0.0
  %629 = vmatprep.subr.mxu0 0.0
  %630 = vmatpush1.msra.mxu0 0.0
  %631 = vmatprep.subr.mxu0 0.0
  %632 = vmatpush1.msra.mxu0 0.0
  %633 = vmatprep.subr.mxu0 0.0
  %634 = vmatpush1.msra.mxu0 0.0
  %635 = vmatprep.subr.mxu0 0.0
  %636 = vmatpush1.msra.mxu0 0.0
  %637 = vmatprep.subr.mxu0 0.0
  %638 = vmatpush1.msra.mxu0 0.0
  %639 = vmatprep.subr.mxu0 0.0
  %640 = vmatpush1.msra.mxu0 0.0
  %641 = vmatprep.subr.mxu0 0.0
  %642 = vmatpush1.msra.mxu0 0.0
  %643 = vmatprep.mubr.f32.mxu0 0.0
  %644 = vmatmul.mubr.f32.gmra.mrb[0].mxu0 %v577
  %v645 = vpop.f32.mrb[0].mxu0
  %v646 = vadd.f32 0.0, %v645
  %v647 = vpop.f32.mrb[0].mxu0
  %648 = vdwg.mxu0
  %v649 = vadd.f32 %v173, %v646
  %v650 = vtanh.pop %v649
  %v651 = vmul.f32 %v650, %v39
  %v652 = vadd.f32 %v651, %v40
  %v653 = vmul.f32 %v652, %v567
  %655 = vrot.lane.b32.xlu0 %v652, 64
  %v656 = vpop.permute.xlu0 %655
  %v658 = vmul.f32 %v652, %v656
  %660 = vrot.lane.b32.xlu0 %v658, 32
  %v661 = vpop.permute.xlu0 %660
  %v663 = vadd.f32 %v653, %v661
  %v664 = vtanh.pop %v663
  %666 = vrot.lane.b32.xlu0 %v664, 64
  %v667 = vpop.permute.xlu0 %666
  %v669 = vmul.f32 %v652, %v667
  %671 = vrot.lane.b32.xlu0 %v669, 32
  %v672 = vpop.permute.xlu0 %671
  %v673 = vsel %vm191, %v672, 0
  %675 = vmatprep.subr.mxu0 0.0
  %676 = vmatpush1.msra.mxu0 %v50
  %677 = vmatprep.subr.mxu0 0.0
  %678 = vmatpush1.msra.mxu0 %v51
  %679 = vmatprep.subr.mxu0 0.0
  %680 = vmatpush1.msra.mxu0 %v52
  %681 = vmatprep.subr.mxu0 0.0
  %682 = vmatpush1.msra.mxu0 %v53
  %683 = vmatprep.subr.mxu0 0.0
  %684 = vmatpush1.msra.mxu0 0.0
  %685 = vmatprep.subr.mxu0 0.0
  %686 = vmatpush1.msra.mxu0 0.0
  %687 = vmatprep.subr.mxu0 0.0
  %688 = vmatpush1.msra.mxu0 0.0
  %689 = vmatprep.subr.mxu0 0.0
  %690 = vmatpush1.msra.mxu0 0.0
  %691 = vmatprep.subr.mxu0 0.0
  %692 = vmatpush1.msra.mxu0 0.0
  %693 = vmatprep.subr.mxu0 0.0
  %694 = vmatpush1.msra.mxu0 0.0
  %695 = vmatprep.subr.mxu0 0.0
  %696 = vmatpush1.msra.mxu0 0.0
  %697 = vmatprep.subr.mxu0 0.0
  %698 = vmatpush1.msra.mxu0 0.0
  %699 = vmatprep.subr.mxu0 0.0
  %700 = vmatpush1.msra.mxu0 0.0
  %701 = vmatprep.subr.mxu0 0.0
  %702 = vmatpush1.msra.mxu0 0.0
  %703 = vmatprep.subr.mxu0 0.0
  %704 = vmatpush1.msra.mxu0 0.0
  %705 = vmatprep.subr.mxu0 0.0
  %706 = vmatpush1.msra.mxu0 0.0
  %707 = vmatprep.subr.mxu0 0.0
  %708 = vmatpush1.msra.mxu0 0.0
  %709 = vmatprep.subr.mxu0 0.0
  %710 = vmatpush1.msra.mxu0 0.0
  %711 = vmatprep.subr.mxu0 0.0
  %712 = vmatpush1.msra.mxu0 0.0
  %713 = vmatprep.subr.mxu0 0.0
  %714 = vmatpush1.msra.mxu0 0.0
  %715 = vmatprep.subr.mxu0 0.0
  %716 = vmatpush1.msra.mxu0 0.0
  %717 = vmatprep.subr.mxu0 0.0
  %718 = vmatpush1.msra.mxu0 0.0
  %719 = vmatprep.subr.mxu0 0.0
  %720 = vmatpush1.msra.mxu0 0.0
  %721 = vmatprep.subr.mxu0 0.0
  %722 = vmatpush1.msra.mxu0 0.0
  %723 = vmatprep.subr.mxu0 0.0
  %724 = vmatpush1.msra.mxu0 0.0
  %725 = vmatprep.subr.mxu0 0.0
  %726 = vmatpush1.msra.mxu0 0.0
  %727 = vmatprep.subr.mxu0 0.0
  %728 = vmatpush1.msra.mxu0 0.0
  %729 = vmatprep.subr.mxu0 0.0
  %730 = vmatpush1.msra.mxu0 0.0
  %731 = vmatprep.subr.mxu0 0.0
  %732 = vmatpush1.msra.mxu0 0.0
  %733 = vmatprep.subr.mxu0 0.0
  %734 = vmatpush1.msra.mxu0 0.0
  %735 = vmatprep.subr.mxu0 0.0
  %736 = vmatpush1.msra.mxu0 0.0
  %737 = vmatprep.subr.mxu0 0.0
  %738 = vmatpush1.msra.mxu0 0.0
  %739 = vmatprep.mubr.f32.mxu0 0.0
  %740 = vmatmul.mubr.f32.gmra.mrb[0].mxu0 %v673
  %v741 = vpop.f32.mrb[0].mxu0
  %v742 = vadd.f32 0.0, %v741
  %v743 = vpop.f32.mrb[0].mxu0
  %744 = vdwg.mxu0
  %v745 = vadd.f32 %v178, %v742
  %v746 = vtanh.pop %v745
  %v747 = vmul.f32 %v746, %v39
  %v748 = vadd.f32 %v747, %v40
  %v749 = vmul.f32 %v748, %v663
  %751 = vrot.lane.b32.xlu0 %v748, 64
  %v752 = vpop.permute.xlu0 %751
  %v754 = vmul.f32 %v748, %v752
  %756 = vrot.lane.b32.xlu0 %v754, 32
  %v757 = vpop.permute.xlu0 %756
  %v759 = vadd.f32 %v749, %v757
  %v760 = vtanh.pop %v759
  %762 = vrot.lane.b32.xlu0 %v760, 64
  %v763 = vpop.permute.xlu0 %762
  %v765 = vmul.f32 %v748, %v763
  %767 = vrot.lane.b32.xlu0 %v765, 32
  %v768 = vpop.permute.xlu0 %767
  %v769 = vsel %vm191, %v768, 0
  %771 = vmatprep.subr.mxu0 0.0
  %772 = vmatpush1.msra.mxu0 %v50
  %773 = vmatprep.subr.mxu0 0.0
  %774 = vmatpush1.msra.mxu0 %v51
  %775 = vmatprep.subr.mxu0 0.0
  %776 = vmatpush1.msra.mxu0 %v52
  %777 = vmatprep.subr.mxu0 0.0
  %778 = vmatpush1.msra.mxu0 %v53
  %779 = vmatprep.subr.mxu0 0.0
  %780 = vmatpush1.msra.mxu0 0.0
  %781 = vmatprep.subr.mxu0 0.0
  %782 = vmatpush1.msra.mxu0 0.0
  %783 = vmatprep.subr.mxu0 0.0
  %784 = vmatpush1.msra.mxu0 0.0
  %785 = vmatprep.subr.mxu0 0.0
  %786 = vmatpush1.msra.mxu0 0.0
  %787 = vmatprep.subr.mxu0 0.0
  %788 = vmatpush1.msra.mxu0 0.0
  %789 = vmatprep.subr.mxu0 0.0
  %790 = vmatpush1.msra.mxu0 0.0
  %791 = vmatprep.subr.mxu0 0.0
  %792 = vmatpush1.msra.mxu0 0.0
  %793 = vmatprep.subr.mxu0 0.0
  %794 = vmatpush1.msra.mxu0 0.0
  %795 = vmatprep.subr.mxu0 0.0
  %796 = vmatpush1.msra.mxu0 0.0
  %797 = vmatprep.subr.mxu0 0.0
  %798 = vmatpush1.msra.mxu0 0.0
  %799 = vmatprep.subr.mxu0 0.0
  %800 = vmatpush1.msra.mxu0 0.0
  %801 = vmatprep.subr.mxu0 0.0
  %802 = vmatpush1.msra.mxu0 0.0
  %803 = vmatprep.subr.mxu0 0.0
  %804 = vmatpush1.msra.mxu0 0.0
  %805 = vmatprep.subr.mxu0 0.0
  %806 = vmatpush1.msra.mxu0 0.0
  %807 = vmatprep.subr.mxu0 0.0
  %808 = vmatpush1.msra.mxu0 0.0
  %809 = vmatprep.subr.mxu0 0.0
  %810 = vmatpush1.msra.mxu0 0.0
  %811 = vmatprep.subr.mxu0 0.0
  %812 = vmatpush1.msra.mxu0 0.0
  %813 = vmatprep.subr.mxu0 0.0
  %814 = vmatpush1.msra.mxu0 0.0
  %815 = vmatprep.subr.mxu0 0.0
  %816 = vmatpush1.msra.mxu0 0.0
  %817 = vmatprep.subr.mxu0 0.0
  %818 = vmatpush1.msra.mxu0 0.0
  %819 = vmatprep.subr.mxu0 0.0
  %820 = vmatpush1.msra.mxu0 0.0
  %821 = vmatprep.subr.mxu0 0.0
  %822 = vmatpush1.msra.mxu0 0.0
  %823 = vmatprep.subr.mxu0 0.0
  %824 = vmatpush1.msra.mxu0 0.0
  %825 = vmatprep.subr.mxu0 0.0
  %826 = vmatpush1.msra.mxu0 0.0
  %827 = vmatprep.subr.mxu0 0.0
  %828 = vmatpush1.msra.mxu0 0.0
  %829 = vmatprep.subr.mxu0 0.0
  %830 = vmatpush1.msra.mxu0 0.0
  %831 = vmatprep.subr.mxu0 0.0
  %832 = vmatpush1.msra.mxu0 0.0
  %833 = vmatprep.subr.mxu0 0.0
  %834 = vmatpush1.msra.mxu0 0.0
  %835 = vmatprep.mubr.f32.mxu0 0.0
  %836 = vmatmul.mubr.f32.gmra.mrb[0].mxu0 %v769
  %v837 = vpop.f32.mrb[0].mxu0
  %v838 = vadd.f32 0.0, %v837
  %v839 = vpop.f32.mrb[0].mxu0
  %840 = vdwg.mxu0
  %v841 = vadd.f32 %v183, %v838
  %v842 = vtanh.pop %v841
  %v843 = vmul.f32 %v842, %v39
  %v844 = vadd.f32 %v843, %v40
  %v845 = vmul.f32 %v844, %v759
  %847 = vrot.lane.b32.xlu0 %v844, 64
  %v848 = vpop.permute.xlu0 %847
  %v850 = vmul.f32 %v844, %v848
  %852 = vrot.lane.b32.xlu0 %v850, 32
  %v853 = vpop.permute.xlu0 %852
  %v855 = vadd.f32 %v845, %v853
  %v856 = vtanh.pop %v855
  %858 = vrot.lane.b32.xlu0 %v856, 64
  %v859 = vpop.permute.xlu0 %858
  %v861 = vmul.f32 %v844, %v859
  %863 = vrot.lane.b32.xlu0 %v861, 32
  %v864 = vpop.permute.xlu0 %863
  %v865 = vsel %vm191, %v864, 0
  %867 = vmatprep.subr.mxu0 0.0
  %868 = vmatpush1.msra.mxu0 %v50
  %869 = vmatprep.subr.mxu0 0.0
  %870 = vmatpush1.msra.mxu0 %v51
  %871 = vmatprep.subr.mxu0 0.0
  %872 = vmatpush1.msra.mxu0 %v52
  %873 = vmatprep.subr.mxu0 0.0
  %874 = vmatpush1.msra.mxu0 %v53
  %875 = vmatprep.subr.mxu0 0.0
  %876 = vmatpush1.msra.mxu0 0.0
  %877 = vmatprep.subr.mxu0 0.0
  %878 = vmatpush1.msra.mxu0 0.0
  %879 = vmatprep.subr.mxu0 0.0
  %880 = vmatpush1.msra.mxu0 0.0
  %881 = vmatprep.subr.mxu0 0.0
  %882 = vmatpush1.msra.mxu0 0.0
  %883 = vmatprep.subr.mxu0 0.0
  %884 = vmatpush1.msra.mxu0 0.0
  %885 = vmatprep.subr.mxu0 0.0
  %886 = vmatpush1.msra.mxu0 0.0
  %887 = vmatprep.subr.mxu0 0.0
  %888 = vmatpush1.msra.mxu0 0.0
  %889 = vmatprep.subr.mxu0 0.0
  %890 = vmatpush1.msra.mxu0 0.0
  %891 = vmatprep.subr.mxu0 0.0
  %892 = vmatpush1.msra.mxu0 0.0
  %893 = vmatprep.subr.mxu0 0.0
  %894 = vmatpush1.msra.mxu0 0.0
  %895 = vmatprep.subr.mxu0 0.0
  %896 = vmatpush1.msra.mxu0 0.0
  %897 = vmatprep.subr.mxu0 0.0
  %898 = vmatpush1.msra.mxu0 0.0
  %899 = vmatprep.subr.mxu0 0.0
  %900 = vmatpush1.msra.mxu0 0.0
  %901 = vmatprep.subr.mxu0 0.0
  %902 = vmatpush1.msra.mxu0 0.0
  %903 = vmatprep.subr.mxu0 0.0
  %904 = vmatpush1.msra.mxu0 0.0
  %905 = vmatprep.subr.mxu0 0.0
  %906 = vmatpush1.msra.mxu0 0.0
  %907 = vmatprep.subr.mxu0 0.0
  %908 = vmatpush1.msra.mxu0 0.0
  %909 = vmatprep.subr.mxu0 0.0
  %910 = vmatpush1.msra.mxu0 0.0
  %911 = vmatprep.subr.mxu0 0.0
  %912 = vmatpush1.msra.mxu0 0.0
  %913 = vmatprep.subr.mxu0 0.0
  %914 = vmatpush1.msra.mxu0 0.0
  %915 = vmatprep.subr.mxu0 0.0
  %916 = vmatpush1.msra.mxu0 0.0
  %917 = vmatprep.subr.mxu0 0.0
  %918 = vmatpush1.msra.mxu0 0.0
  %919 = vmatprep.subr.mxu0 0.0
  %920 = vmatpush1.msra.mxu0 0.0
  %921 = vmatprep.subr.mxu0 0.0
  %922 = vmatpush1.msra.mxu0 0.0
  %923 = vmatprep.subr.mxu0 0.0
  %924 = vmatpush1.msra.mxu0 0.0
  %925 = vmatprep.subr.mxu0 0.0
  %926 = vmatpush1.msra.mxu0 0.0
  %927 = vmatprep.subr.mxu0 0.0
  %928 = vmatpush1.msra.mxu0 0.0
  %929 = vmatprep.subr.mxu0 0.0
  %930 = vmatpush1.msra.mxu0 0.0
  %931 = vmatprep.mubr.f32.mxu0 0.0
  %932 = vmatmul.mubr.f32.gmra.mrb[0].mxu0 %v865
  %v933 = vpop.f32.mrb[0].mxu0
  %v934 = vadd.f32 0.0, %v933
  %v935 = vpop.f32.mrb[0].mxu0
  %936 = vdwg.mxu0
  %v937 = vadd.f32 %v188, %v934
  %v938 = vtanh.pop %v937
  %v939 = vmul.f32 %v938, %v39
  %v940 = vadd.f32 %v939, %v40
  %v941 = vmul.f32 %v940, %v855
  %943 = vrot.lane.b32.xlu0 %v940, 64
  %v944 = vpop.permute.xlu0 %943
  %v946 = vmul.f32 %v940, %v944
  %948 = vrot.lane.b32.xlu0 %v946, 32
  %v949 = vpop.permute.xlu0 %948
  %v951 = vadd.f32 %v941, %v949
  %v952 = vtanh.pop %v951
  %954 = vrot.lane.b32.xlu0 %v952, 64
  %v955 = vpop.permute.xlu0 %954
  %v957 = vmul.f32 %v940, %v955
  %v958 = vld [vmem:[%s4] sm:$0xff]
  %v959 = vld [vmem:[%s4 + $0x8] sm:$0xff]
  %v960 = vld [vmem:[%s4 + $0x10] sm:$0xff]
  %v961 = vld [vmem:[%s4 + $0x18] sm:$0xff]
  %v962 = vld [vmem:[%s5] sm:$0xff]
  %v963 = vld [vmem:[%s5 + $0x8] sm:$0xff]
  %v964 = vld [vmem:[%s5 + $0x10] sm:$0xff]
  %v965 = vld [vmem:[%s5 + $0x18] sm:$0xff]
  %v966 = vld [vmem:[%s6] sm:$0x1]
  %v968 = vlaneseq
  %v969 = vshrl.u32 %v968, 7
  %v970 = vsub.s32 0, %v969
  %v971 = vrot.slane %v966, %v970
  %973 = vmatprep.subr.mxu0 0.0
  %974 = vmatpush1.msra.mxu0 %v958
  %975 = vmatprep.subr.mxu0 0.0
  %976 = vmatpush1.msra.mxu0 %v959
  %977 = vmatprep.subr.mxu0 0.0
  %978 = vmatpush1.msra.mxu0 %v960
  %979 = vmatprep.subr.mxu0 0.0
  %980 = vmatpush1.msra.mxu0 %v961
  %981 = vmatprep.subr.mxu0 0.0
  %982 = vmatpush1.msra.mxu0 0.0
  %983 = vmatprep.subr.mxu0 0.0
  %984 = vmatpush1.msra.mxu0 0.0
  %985 = vmatprep.subr.mxu0 0.0
  %986 = vmatpush1.msra.mxu0 0.0
  %987 = vmatprep.subr.mxu0 0.0
  %988 = vmatpush1.msra.mxu0 0.0
  %989 = vmatprep.subr.mxu0 0.0
  %990 = vmatpush1.msra.mxu0 0.0
  %991 = vmatprep.subr.mxu0 0.0
  %992 = vmatpush1.msra.mxu0 0.0
  %993 = vmatprep.subr.mxu0 0.0
  %994 = vmatpush1.msra.mxu0 0.0
  %995 = vmatprep.subr.mxu0 0.0
  %996 = vmatpush1.msra.mxu0 0.0
  %997 = vmatprep.subr.mxu0 0.0
  %998 = vmatpush1.msra.mxu0 0.0
  %999 = vmatprep.subr.mxu0 0.0
  %1000 = vmatpush1.msra.mxu0 0.0
  %1001 = vmatprep.subr.mxu0 0.0
  %1002 = vmatpush1.msra.mxu0 0.0
  %1003 = vmatprep.subr.mxu0 0.0
  %1004 = vmatpush1.msra.mxu0 0.0
  %1005 = vmatprep.subr.mxu0 0.0
  %1006 = vmatpush1.msra.mxu0 0.0
  %1007 = vmatprep.subr.mxu0 0.0
  %1008 = vmatpush1.msra.mxu0 0.0
  %1009 = vmatprep.subr.mxu0 0.0
  %1010 = vmatpush1.msra.mxu0 0.0
  %1011 = vmatprep.subr.mxu0 0.0
  %1012 = vmatpush1.msra.mxu0 0.0
  %1013 = vmatprep.subr.mxu0 0.0
  %1014 = vmatpush1.msra.mxu0 0.0
  %1015 = vmatprep.subr.mxu0 0.0
  %1016 = vmatpush1.msra.mxu0 0.0
  %1017 = vmatprep.subr.mxu0 0.0
  %1018 = vmatpush1.msra.mxu0 0.0
  %1019 = vmatprep.subr.mxu0 0.0
  %1020 = vmatpush1.msra.mxu0 0.0
  %1021 = vmatprep.subr.mxu0 0.0
  %1022 = vmatpush1.msra.mxu0 0.0
  %1023 = vmatprep.subr.mxu0 0.0
  %1024 = vmatpush1.msra.mxu0 0.0
  %1025 = vmatprep.subr.mxu0 0.0
  %1026 = vmatpush1.msra.mxu0 0.0
  %1027 = vmatprep.subr.mxu0 0.0
  %1028 = vmatpush1.msra.mxu0 0.0
  %1029 = vmatprep.subr.mxu0 0.0
  %1030 = vmatpush1.msra.mxu0 0.0
  %1031 = vmatprep.subr.mxu0 0.0
  %1032 = vmatpush1.msra.mxu0 0.0
  %1033 = vmatprep.subr.mxu0 0.0
  %1034 = vmatpush1.msra.mxu0 0.0
  %1035 = vmatprep.subr.mxu0 0.0
  %1036 = vmatpush1.msra.mxu0 0.0
  %1037 = vmatprep.mubr.f32.mxu0 0.0
  %1038 = vmatmul.mubr.f32.gmra.mrb[0].mxu0 %v289
  %v1039 = vpop.f32.mrb[0].mxu0
  %v1040 = vadd.f32 %v971, %v1039
  %v1041 = vpop.f32.mrb[0].mxu0
  %1042 = vdwg.mxu0
  %1043 = vmatprep.subr.mxu0 0.0
  %1044 = vmatpush1.msra.mxu0 %v962
  %1045 = vmatprep.subr.mxu0 0.0
  %1046 = vmatpush1.msra.mxu0 %v963
  %1047 = vmatprep.subr.mxu0 0.0
  %1048 = vmatpush1.msra.mxu0 %v964
  %1049 = vmatprep.subr.mxu0 0.0
  %1050 = vmatpush1.msra.mxu0 %v965
  %1051 = vmatprep.subr.mxu0 0.0
  %1052 = vmatpush1.msra.mxu0 0.0
  %1053 = vmatprep.subr.mxu0 0.0
  %1054 = vmatpush1.msra.mxu0 0.0
  %1055 = vmatprep.subr.mxu0 0.0
  %1056 = vmatpush1.msra.mxu0 0.0
  %1057 = vmatprep.subr.mxu0 0.0
  %1058 = vmatpush1.msra.mxu0 0.0
  %1059 = vmatprep.subr.mxu0 0.0
  %1060 = vmatpush1.msra.mxu0 0.0
  %1061 = vmatprep.subr.mxu0 0.0
  %1062 = vmatpush1.msra.mxu0 0.0
  %1063 = vmatprep.subr.mxu0 0.0
  %1064 = vmatpush1.msra.mxu0 0.0
  %1065 = vmatprep.subr.mxu0 0.0
  %1066 = vmatpush1.msra.mxu0 0.0
  %1067 = vmatprep.subr.mxu0 0.0
  %1068 = vmatpush1.msra.mxu0 0.0
  %1069 = vmatprep.subr.mxu0 0.0
  %1070 = vmatpush1.msra.mxu0 0.0
  %1071 = vmatprep.subr.mxu0 0.0
  %1072 = vmatpush1.msra.mxu0 0.0
  %1073 = vmatprep.subr.mxu0 0.0
  %1074 = vmatpush1.msra.mxu0 0.0
  %1075 = vmatprep.subr.mxu0 0.0
  %1076 = vmatpush1.msra.mxu0 0.0
  %1077 = vmatprep.subr.mxu0 0.0
  %1078 = vmatpush1.msra.mxu0 0.0
  %1079 = vmatprep.subr.mxu0 0.0
  %1080 = vmatpush1.msra.mxu0 0.0
  %1081 = vmatprep.subr.mxu0 0.0
  %1082 = vmatpush1.msra.mxu0 0.0
  %1083 = vmatprep.subr.mxu0 0.0
  %1084 = vmatpush1.msra.mxu0 0.0
  %1085 = vmatprep.subr.mxu0 0.0
  %1086 = vmatpush1.msra.mxu0 0.0
  %1087 = vmatprep.subr.mxu0 0.0
  %1088 = vmatpush1.msra.mxu0 0.0
  %1089 = vmatprep.subr.mxu0 0.0
  %1090 = vmatpush1.msra.mxu0 0.0
  %1091 = vmatprep.subr.mxu0 0.0
  %1092 = vmatpush1.msra.mxu0 0.0
  %1093 = vmatprep.subr.mxu0 0.0
  %1094 = vmatpush1.msra.mxu0 0.0
  %1095 = vmatprep.subr.mxu0 0.0
  %1096 = vmatpush1.msra.mxu0 0.0
  %1097 = vmatprep.subr.mxu0 0.0
  %1098 = vmatpush1.msra.mxu0 0.0
  %1099 = vmatprep.subr.mxu0 0.0
  %1100 = vmatpush1.msra.mxu0 0.0
  %1101 = vmatprep.subr.mxu0 0.0
  %1102 = vmatpush1.msra.mxu0 0.0
  %1103 = vmatprep.subr.mxu0 0.0
  %1104 = vmatpush1.msra.mxu0 0.0
  %1105 = vmatprep.subr.mxu0 0.0
  %1106 = vmatpush1.msra.mxu0 0.0
  %1107 = vmatprep.mubr.f32.mxu0 0.0
  %1108 = vmatmul.mubr.f32.gmra.mrb[0].mxu0 %v193
  %v1109 = vpop.f32.mrb[0].mxu0
  %v1110 = vadd.f32 0.0, %v1109
  %v1111 = vpop.f32.mrb[0].mxu0
  %1112 = vdwg.mxu0
  %v1113 = vadd.f32 %v1040, %v1110
  %v1114 = vtanh.pop %v1113
  %v1115 = vmul.f32 %v1114, %v39
  %v1116 = vadd.f32 %v1115, %v40
  %v1117 = vmul.f32 %v1116, 0.0
  %1119 = vrot.lane.b32.xlu0 %v1116, 64
  %v1120 = vpop.permute.xlu0 %1119
  %v1122 = vmul.f32 %v1116, %v1120
  %1124 = vrot.lane.b32.xlu0 %v1122, 32
  %v1125 = vpop.permute.xlu0 %1124
  %v1127 = vadd.f32 %v1117, %v1125
  %v1128 = vtanh.pop %v1127
  %1130 = vrot.lane.b32.xlu0 %v1128, 64
  %v1131 = vpop.permute.xlu0 %1130
  %v1133 = vmul.f32 %v1116, %v1131
  %1134 = vmatprep.subr.mxu0 0.0
  %1135 = vmatpush1.msra.mxu0 %v958
  %1136 = vmatprep.subr.mxu0 0.0
  %1137 = vmatpush1.msra.mxu0 %v959
  %1138 = vmatprep.subr.mxu0 0.0
  %1139 = vmatpush1.msra.mxu0 %v960
  %1140 = vmatprep.subr.mxu0 0.0
  %1141 = vmatpush1.msra.mxu0 %v961
  %1142 = vmatprep.subr.mxu0 0.0
  %1143 = vmatpush1.msra.mxu0 0.0
  %1144 = vmatprep.subr.mxu0 0.0
  %1145 = vmatpush1.msra.mxu0 0.0
  %1146 = vmatprep.subr.mxu0 0.0
  %1147 = vmatpush1.msra.mxu0 0.0
  %1148 = vmatprep.subr.mxu0 0.0
  %1149 = vmatpush1.msra.mxu0 0.0
  %1150 = vmatprep.subr.mxu0 0.0
  %1151 = vmatpush1.msra.mxu0 0.0
  %1152 = vmatprep.subr.mxu0 0.0
  %1153 = vmatpush1.msra.mxu0 0.0
  %1154 = vmatprep.subr.mxu0 0.0
  %1155 = vmatpush1.msra.mxu0 0.0
  %1156 = vmatprep.subr.mxu0 0.0
  %1157 = vmatpush1.msra.mxu0 0.0
  %1158 = vmatprep.subr.mxu0 0.0
  %1159 = vmatpush1.msra.mxu0 0.0
  %1160 = vmatprep.subr.mxu0 0.0
  %1161 = vmatpush1.msra.mxu0 0.0
  %1162 = vmatprep.subr.mxu0 0.0
  %1163 = vmatpush1.msra.mxu0 0.0
  %1164 = vmatprep.subr.mxu0 0.0
  %1165 = vmatpush1.msra.mxu0 0.0
  %1166 = vmatprep.subr.mxu0 0.0
  %1167 = vmatpush1.msra.mxu0 0.0
  %1168 = vmatprep.subr.mxu0 0.0
  %1169 = vmatpush1.msra.mxu0 0.0
  %1170 = vmatprep.subr.mxu0 0.0
  %1171 = vmatpush1.msra.mxu0 0.0
  %1172 = vmatprep.subr.mxu0 0.0
  %1173 = vmatpush1.msra.mxu0 0.0
  %1174 = vmatprep.subr.mxu0 0.0
  %1175 = vmatpush1.msra.mxu0 0.0
  %1176 = vmatprep.subr.mxu0 0.0
  %1177 = vmatpush1.msra.mxu0 0.0
  %1178 = vmatprep.subr.mxu0 0.0
  %1179 = vmatpush1.msra.mxu0 0.0
  %1180 = vmatprep.subr.mxu0 0.0
  %1181 = vmatpush1.msra.mxu0 0.0
  %1182 = vmatprep.subr.mxu0 0.0
  %1183 = vmatpush1.msra.mxu0 0.0
  %1184 = vmatprep.subr.mxu0 0.0
  %1185 = vmatpush1.msra.mxu0 0.0
  %1186 = vmatprep.subr.mxu0 0.0
  %1187 = vmatpush1.msra.mxu0 0.0
  %1188 = vmatprep.subr.mxu0 0.0
  %1189 = vmatpush1.msra.mxu0 0.0
  %1190 = vmatprep.subr.mxu0 0.0
  %1191 = vmatpush1.msra.mxu0 0.0
  %1192 = vmatprep.subr.mxu0 0.0
  %1193 = vmatpush1.msra.mxu0 0.0
  %1194 = vmatprep.subr.mxu0 0.0
  %1195 = vmatpush1.msra.mxu0 0.0
  %1196 = vmatprep.subr.mxu0 0.0
  %1197 = vmatpush1.msra.mxu0 0.0
  %1198 = vmatprep.mubr.f32.mxu0 0.0
  %1199 = vmatmul.mubr.f32.gmra.mrb[0].mxu0 %v385
  %v1200 = vpop.f32.mrb[0].mxu0
  %v1201 = vadd.f32 %v971, %v1200
  %v1202 = vpop.f32.mrb[0].mxu0
  %1203 = vdwg.mxu0
  %1205 = vrot.lane.b32.xlu0 %v1133, 32
  %v1206 = vpop.permute.xlu0 %1205
  %v1207 = vsel %vm191, %v1206, 0
  %1209 = vmatprep.subr.mxu0 0.0
  %1210 = vmatpush1.msra.mxu0 %v962
  %1211 = vmatprep.subr.mxu0 0.0
  %1212 = vmatpush1.msra.mxu0 %v963
  %1213 = vmatprep.subr.mxu0 0.0
  %1214 = vmatpush1.msra.mxu0 %v964
  %1215 = vmatprep.subr.mxu0 0.0
  %1216 = vmatpush1.msra.mxu0 %v965
  %1217 = vmatprep.subr.mxu0 0.0
  %1218 = vmatpush1.msra.mxu0 0.0
  %1219 = vmatprep.subr.mxu0 0.0
  %1220 = vmatpush1.msra.mxu0 0.0
  %1221 = vmatprep.subr.mxu0 0.0
  %1222 = vmatpush1.msra.mxu0 0.0
  %1223 = vmatprep.subr.mxu0 0.0
  %1224 = vmatpush1.msra.mxu0 0.0
  %1225 = vmatprep.subr.mxu0 0.0
  %1226 = vmatpush1.msra.mxu0 0.0
  %1227 = vmatprep.subr.mxu0 0.0
  %1228 = vmatpush1.msra.mxu0 0.0
  %1229 = vmatprep.subr.mxu0 0.0
  %1230 = vmatpush1.msra.mxu0 0.0
  %1231 = vmatprep.subr.mxu0 0.0
  %1232 = vmatpush1.msra.mxu0 0.0
  %1233 = vmatprep.subr.mxu0 0.0
  %1234 = vmatpush1.msra.mxu0 0.0
  %1235 = vmatprep.subr.mxu0 0.0
  %1236 = vmatpush1.msra.mxu0 0.0
  %1237 = vmatprep.subr.mxu0 0.0
  %1238 = vmatpush1.msra.mxu0 0.0
  %1239 = vmatprep.subr.mxu0 0.0
  %1240 = vmatpush1.msra.mxu0 0.0
  %1241 = vmatprep.subr.mxu0 0.0
  %1242 = vmatpush1.msra.mxu0 0.0
  %1243 = vmatprep.subr.mxu0 0.0
  %1244 = vmatpush1.msra.mxu0 0.0
  %1245 = vmatprep.subr.mxu0 0.0
  %1246 = vmatpush1.msra.mxu0 0.0
  %1247 = vmatprep.subr.mxu0 0.0
  %1248 = vmatpush1.msra.mxu0 0.0
  %1249 = vmatprep.subr.mxu0 0.0
  %1250 = vmatpush1.msra.mxu0 0.0
  %1251 = vmatprep.subr.mxu0 0.0
  %1252 = vmatpush1.msra.mxu0 0.0
  %1253 = vmatprep.subr.mxu0 0.0
  %1254 = vmatpush1.msra.mxu0 0.0
  %1255 = vmatprep.subr.mxu0 0.0
  %1256 = vmatpush1.msra.mxu0 0.0
  %1257 = vmatprep.subr.mxu0 0.0
  %1258 = vmatpush1.msra.mxu0 0.0
  %1259 = vmatprep.subr.mxu0 0.0
  %1260 = vmatpush1.msra.mxu0 0.0
  %1261 = vmatprep.subr.mxu0 0.0
  %1262 = vmatpush1.msra.mxu0 0.0
  %1263 = vmatprep.subr.mxu0 0.0
  %1264 = vmatpush1.msra.mxu0 0.0
  %1265 = vmatprep.subr.mxu0 0.0
  %1266 = vmatpush1.msra.mxu0 0.0
  %1267 = vmatprep.subr.mxu0 0.0
  %1268 = vmatpush1.msra.mxu0 0.0
  %1269 = vmatprep.subr.mxu0 0.0
  %1270 = vmatpush1.msra.mxu0 0.0
  %1271 = vmatprep.subr.mxu0 0.0
  %1272 = vmatpush1.msra.mxu0 0.0
  %1273 = vmatprep.mubr.f32.mxu0 0.0
  %1274 = vmatmul.mubr.f32.gmra.mrb[0].mxu0 %v1207
  %v1275 = vpop.f32.mrb[0].mxu0
  %v1276 = vadd.f32 0.0, %v1275
  %v1277 = vpop.f32.mrb[0].mxu0
  %1278 = vdwg.mxu0
  %v1279 = vadd.f32 %v1201, %v1276
  %v1280 = vtanh.pop %v1279
  %v1281 = vmul.f32 %v1280, %v39
  %v1282 = vadd.f32 %v1281, %v40
  %v1283 = vmul.f32 %v1282, %v1127
  %1285 = vrot.lane.b32.xlu0 %v1282, 64
  %v1286 = vpop.permute.xlu0 %1285
  %v1288 = vmul.f32 %v1282, %v1286
  %1290 = vrot.lane.b32.xlu0 %v1288, 32
  %v1291 = vpop.permute.xlu0 %1290
  %v1293 = vadd.f32 %v1283, %v1291
  %v1294 = vtanh.pop %v1293
  %1296 = vrot.lane.b32.xlu0 %v1294, 64
  %v1297 = vpop.permute.xlu0 %1296
  %v1299 = vmul.f32 %v1282, %v1297
  %1300 = vmatprep.subr.mxu0 0.0
  %1301 = vmatpush1.msra.mxu0 %v958
  %1302 = vmatprep.subr.mxu0 0.0
  %1303 = vmatpush1.msra.mxu0 %v959
  %1304 = vmatprep.subr.mxu0 0.0
  %1305 = vmatpush1.msra.mxu0 %v960
  %1306 = vmatprep.subr.mxu0 0.0
  %1307 = vmatpush1.msra.mxu0 %v961
  %1308 = vmatprep.subr.mxu0 0.0
  %1309 = vmatpush1.msra.mxu0 0.0
  %1310 = vmatprep.subr.mxu0 0.0
  %1311 = vmatpush1.msra.mxu0 0.0
  %1312 = vmatprep.subr.mxu0 0.0
  %1313 = vmatpush1.msra.mxu0 0.0
  %1314 = vmatprep.subr.mxu0 0.0
  %1315 = vmatpush1.msra.mxu0 0.0
  %1316 = vmatprep.subr.mxu0 0.0
  %1317 = vmatpush1.msra.mxu0 0.0
  %1318 = vmatprep.subr.mxu0 0.0
  %1319 = vmatpush1.msra.mxu0 0.0
  %1320 = vmatprep.subr.mxu0 0.0
  %1321 = vmatpush1.msra.mxu0 0.0
  %1322 = vmatprep.subr.mxu0 0.0
  %1323 = vmatpush1.msra.mxu0 0.0
  %1324 = vmatprep.subr.mxu0 0.0
  %1325 = vmatpush1.msra.mxu0 0.0
  %1326 = vmatprep.subr.mxu0 0.0
  %1327 = vmatpush1.msra.mxu0 0.0
  %1328 = vmatprep.subr.mxu0 0.0
  %1329 = vmatpush1.msra.mxu0 0.0
  %1330 = vmatprep.subr.mxu0 0.0
  %1331 = vmatpush1.msra.mxu0 0.0
  %1332 = vmatprep.subr.mxu0 0.0
  %1333 = vmatpush1.msra.mxu0 0.0
  %1334 = vmatprep.subr.mxu0 0.0
  %1335 = vmatpush1.msra.mxu0 0.0
  %1336 = vmatprep.subr.mxu0 0.0
  %1337 = vmatpush1.msra.mxu0 0.0
  %1338 = vmatprep.subr.mxu0 0.0
  %1339 = vmatpush1.msra.mxu0 0.0
  %1340 = vmatprep.subr.mxu0 0.0
  %1341 = vmatpush1.msra.mxu0 0.0
  %1342 = vmatprep.subr.mxu0 0.0
  %1343 = vmatpush1.msra.mxu0 0.0
  %1344 = vmatprep.subr.mxu0 0.0
  %1345 = vmatpush1.msra.mxu0 0.0
  %1346 = vmatprep.subr.mxu0 0.0
  %1347 = vmatpush1.msra.mxu0 0.0
  %1348 = vmatprep.subr.mxu0 0.0
  %1349 = vmatpush1.msra.mxu0 0.0
  %1350 = vmatprep.subr.mxu0 0.0
  %1351 = vmatpush1.msra.mxu0 0.0
  %1352 = vmatprep.subr.mxu0 0.0
  %1353 = vmatpush1.msra.mxu0 0.0
  %1354 = vmatprep.subr.mxu0 0.0
  %1355 = vmatpush1.msra.mxu0 0.0
  %1356 = vmatprep.subr.mxu0 0.0
  %1357 = vmatpush1.msra.mxu0 0.0
  %1358 = vmatprep.subr.mxu0 0.0
  %1359 = vmatpush1.msra.mxu0 0.0
  %1360 = vmatprep.subr.mxu0 0.0
  %1361 = vmatpush1.msra.mxu0 0.0
  %1362 = vmatprep.subr.mxu0 0.0
  %1363 = vmatpush1.msra.mxu0 0.0
  %1364 = vmatprep.mubr.f32.mxu0 0.0
  %1365 = vmatmul.mubr.f32.gmra.mrb[0].mxu0 %v481
  %v1366 = vpop.f32.mrb[0].mxu0
  %v1367 = vadd.f32 %v971, %v1366
  %v1368 = vpop.f32.mrb[0].mxu0
  %1369 = vdwg.mxu0
  %1371 = vrot.lane.b32.xlu0 %v1299, 32
  %v1372 = vpop.permute.xlu0 %1371
  %v1373 = vsel %vm191, %v1372, 0
  %1375 = vmatprep.subr.mxu0 0.0
  %1376 = vmatpush1.msra.mxu0 %v962
  %1377 = vmatprep.subr.mxu0 0.0
  %1378 = vmatpush1.msra.mxu0 %v963
  %1379 = vmatprep.subr.mxu0 0.0
  %1380 = vmatpush1.msra.mxu0 %v964
  %1381 = vmatprep.subr.mxu0 0.0
  %1382 = vmatpush1.msra.mxu0 %v965
  %1383 = vmatprep.subr.mxu0 0.0
  %1384 = vmatpush1.msra.mxu0 0.0
  %1385 = vmatprep.subr.mxu0 0.0
  %1386 = vmatpush1.msra.mxu0 0.0
  %1387 = vmatprep.subr.mxu0 0.0
  %1388 = vmatpush1.msra.mxu0 0.0
  %1389 = vmatprep.subr.mxu0 0.0
  %1390 = vmatpush1.msra.mxu0 0.0
  %1391 = vmatprep.subr.mxu0 0.0
  %1392 = vmatpush1.msra.mxu0 0.0
  %1393 = vmatprep.subr.mxu0 0.0
  %1394 = vmatpush1.msra.mxu0 0.0
  %1395 = vmatprep.subr.mxu0 0.0
  %1396 = vmatpush1.msra.mxu0 0.0
  %1397 = vmatprep.subr.mxu0 0.0
  %1398 = vmatpush1.msra.mxu0 0.0
  %1399 = vmatprep.subr.mxu0 0.0
  %1400 = vmatpush1.msra.mxu0 0.0
  %1401 = vmatprep.subr.mxu0 0.0
  %1402 = vmatpush1.msra.mxu0 0.0
  %1403 = vmatprep.subr.mxu0 0.0
  %1404 = vmatpush1.msra.mxu0 0.0
  %1405 = vmatprep.subr.mxu0 0.0
  %1406 = vmatpush1.msra.mxu0 0.0
  %1407 = vmatprep.subr.mxu0 0.0
  %1408 = vmatpush1.msra.mxu0 0.0
  %1409 = vmatprep.subr.mxu0 0.0
  %1410 = vmatpush1.msra.mxu0 0.0
  %1411 = vmatprep.subr.mxu0 0.0
  %1412 = vmatpush1.msra.mxu0 0.0
  %1413 = vmatprep.subr.mxu0 0.0
  %1414 = vmatpush1.msra.mxu0 0.0
  %1415 = vmatprep.subr.mxu0 0.0
  %1416 = vmatpush1.msra.mxu0 0.0
  %1417 = vmatprep.subr.mxu0 0.0
  %1418 = vmatpush1.msra.mxu0 0.0
  %1419 = vmatprep.subr.mxu0 0.0
  %1420 = vmatpush1.msra.mxu0 0.0
  %1421 = vmatprep.subr.mxu0 0.0
  %1422 = vmatpush1.msra.mxu0 0.0
  %1423 = vmatprep.subr.mxu0 0.0
  %1424 = vmatpush1.msra.mxu0 0.0
  %1425 = vmatprep.subr.mxu0 0.0
  %1426 = vmatpush1.msra.mxu0 0.0
  %1427 = vmatprep.subr.mxu0 0.0
  %1428 = vmatpush1.msra.mxu0 0.0
  %1429 = vmatprep.subr.mxu0 0.0
  %1430 = vmatpush1.msra.mxu0 0.0
  %1431 = vmatprep.subr.mxu0 0.0
  %1432 = vmatpush1.msra.mxu0 0.0
  %1433 = vmatprep.subr.mxu0 0.0
  %1434 = vmatpush1.msra.mxu0 0.0
  %1435 = vmatprep.subr.mxu0 0.0
  %1436 = vmatpush1.msra.mxu0 0.0
  %1437 = vmatprep.subr.mxu0 0.0
  %1438 = vmatpush1.msra.mxu0 0.0
  %1439 = vmatprep.mubr.f32.mxu0 0.0
  %1440 = vmatmul.mubr.f32.gmra.mrb[0].mxu0 %v1373
  %v1441 = vpop.f32.mrb[0].mxu0
  %v1442 = vadd.f32 0.0, %v1441
  %v1443 = vpop.f32.mrb[0].mxu0
  %1444 = vdwg.mxu0
  %v1445 = vadd.f32 %v1367, %v1442
  %v1446 = vtanh.pop %v1445
  %v1447 = vmul.f32 %v1446, %v39
  %v1448 = vadd.f32 %v1447, %v40
  %v1449 = vmul.f32 %v1448, %v1293
  %1451 = vrot.lane.b32.xlu0 %v1448, 64
  %v1452 = vpop.permute.xlu0 %1451
  %v1454 = vmul.f32 %v1448, %v1452
  %1456 = vrot.lane.b32.xlu0 %v1454, 32
  %v1457 = vpop.permute.xlu0 %1456
  %v1459 = vadd.f32 %v1449, %v1457
  %v1460 = vtanh.pop %v1459
  %1462 = vrot.lane.b32.xlu0 %v1460, 64
  %v1463 = vpop.permute.xlu0 %1462
  %v1465 = vmul.f32 %v1448, %v1463
  %1466 = vmatprep.subr.mxu0 0.0
  %1467 = vmatpush1.msra.mxu0 %v958
  %1468 = vmatprep.subr.mxu0 0.0
  %1469 = vmatpush1.msra.mxu0 %v959
  %1470 = vmatprep.subr.mxu0 0.0
  %1471 = vmatpush1.msra.mxu0 %v960
  %1472 = vmatprep.subr.mxu0 0.0
  %1473 = vmatpush1.msra.mxu0 %v961
  %1474 = vmatprep.subr.mxu0 0.0
  %1475 = vmatpush1.msra.mxu0 0.0
  %1476 = vmatprep.subr.mxu0 0.0
  %1477 = vmatpush1.msra.mxu0 0.0
  %1478 = vmatprep.subr.mxu0 0.0
  %1479 = vmatpush1.msra.mxu0 0.0
  %1480 = vmatprep.subr.mxu0 0.0
  %1481 = vmatpush1.msra.mxu0 0.0
  %1482 = vmatprep.subr.mxu0 0.0
  %1483 = vmatpush1.msra.mxu0 0.0
  %1484 = vmatprep.subr.mxu0 0.0
  %1485 = vmatpush1.msra.mxu0 0.0
  %1486 = vmatprep.subr.mxu0 0.0
  %1487 = vmatpush1.msra.mxu0 0.0
  %1488 = vmatprep.subr.mxu0 0.0
  %1489 = vmatpush1.msra.mxu0 0.0
  %1490 = vmatprep.subr.mxu0 0.0
  %1491 = vmatpush1.msra.mxu0 0.0
  %1492 = vmatprep.subr.mxu0 0.0
  %1493 = vmatpush1.msra.mxu0 0.0
  %1494 = vmatprep.subr.mxu0 0.0
  %1495 = vmatpush1.msra.mxu0 0.0
  %1496 = vmatprep.subr.mxu0 0.0
  %1497 = vmatpush1.msra.mxu0 0.0
  %1498 = vmatprep.subr.mxu0 0.0
  %1499 = vmatpush1.msra.mxu0 0.0
  %1500 = vmatprep.subr.mxu0 0.0
  %1501 = vmatpush1.msra.mxu0 0.0
  %1502 = vmatprep.subr.mxu0 0.0
  %1503 = vmatpush1.msra.mxu0 0.0
  %1504 = vmatprep.subr.mxu0 0.0
  %1505 = vmatpush1.msra.mxu0 0.0
  %1506 = vmatprep.subr.mxu0 0.0
  %1507 = vmatpush1.msra.mxu0 0.0
  %1508 = vmatprep.subr.mxu0 0.0
  %1509 = vmatpush1.msra.mxu0 0.0
  %1510 = vmatprep.subr.mxu0 0.0
  %1511 = vmatpush1.msra.mxu0 0.0
  %1512 = vmatprep.subr.mxu0 0.0
  %1513 = vmatpush1.msra.mxu0 0.0
  %1514 = vmatprep.subr.mxu0 0.0
  %1515 = vmatpush1.msra.mxu0 0.0
  %1516 = vmatprep.subr.mxu0 0.0
  %1517 = vmatpush1.msra.mxu0 0.0
  %1518 = vmatprep.subr.mxu0 0.0
  %1519 = vmatpush1.msra.mxu0 0.0
  %1520 = vmatprep.subr.mxu0 0.0
  %1521 = vmatpush1.msra.mxu0 0.0
  %1522 = vmatprep.subr.mxu0 0.0
  %1523 = vmatpush1.msra.mxu0 0.0
  %1524 = vmatprep.subr.mxu0 0.0
  %1525 = vmatpush1.msra.mxu0 0.0
  %1526 = vmatprep.subr.mxu0 0.0
  %1527 = vmatpush1.msra.mxu0 0.0
  %1528 = vmatprep.subr.mxu0 0.0
  %1529 = vmatpush1.msra.mxu0 0.0
  %1530 = vmatprep.mubr.f32.mxu0 0.0
  %1531 = vmatmul.mubr.f32.gmra.mrb[0].mxu0 %v577
  %v1532 = vpop.f32.mrb[0].mxu0
  %v1533 = vadd.f32 %v971, %v1532
  %v1534 = vpop.f32.mrb[0].mxu0
  %1535 = vdwg.mxu0
  %1537 = vrot.lane.b32.xlu0 %v1465, 32
  %v1538 = vpop.permute.xlu0 %1537
  %v1539 = vsel %vm191, %v1538, 0
  %1541 = vmatprep.subr.mxu0 0.0
  %1542 = vmatpush1.msra.mxu0 %v962
  %1543 = vmatprep.subr.mxu0 0.0
  %1544 = vmatpush1.msra.mxu0 %v963
  %1545 = vmatprep.subr.mxu0 0.0
  %1546 = vmatpush1.msra.mxu0 %v964
  %1547 = vmatprep.subr.mxu0 0.0
  %1548 = vmatpush1.msra.mxu0 %v965
  %1549 = vmatprep.subr.mxu0 0.0
  %1550 = vmatpush1.msra.mxu0 0.0
  %1551 = vmatprep.subr.mxu0 0.0
  %1552 = vmatpush1.msra.mxu0 0.0
  %1553 = vmatprep.subr.mxu0 0.0
  %1554 = vmatpush1.msra.mxu0 0.0
  %1555 = vmatprep.subr.mxu0 0.0
  %1556 = vmatpush1.msra.mxu0 0.0
  %1557 = vmatprep.subr.mxu0 0.0
  %1558 = vmatpush1.msra.mxu0 0.0
  %1559 = vmatprep.subr.mxu0 0.0
  %1560 = vmatpush1.msra.mxu0 0.0
  %1561 = vmatprep.subr.mxu0 0.0
  %1562 = vmatpush1.msra.mxu0 0.0
  %1563 = vmatprep.subr.mxu0 0.0
  %1564 = vmatpush1.msra.mxu0 0.0
  %1565 = vmatprep.subr.mxu0 0.0
  %1566 = vmatpush1.msra.mxu0 0.0
  %1567 = vmatprep.subr.mxu0 0.0
  %1568 = vmatpush1.msra.mxu0 0.0
  %1569 = vmatprep.subr.mxu0 0.0
  %1570 = vmatpush1.msra.mxu0 0.0
  %1571 = vmatprep.subr.mxu0 0.0
  %1572 = vmatpush1.msra.mxu0 0.0
  %1573 = vmatprep.subr.mxu0 0.0
  %1574 = vmatpush1.msra.mxu0 0.0
  %1575 = vmatprep.subr.mxu0 0.0
  %1576 = vmatpush1.msra.mxu0 0.0
  %1577 = vmatprep.subr.mxu0 0.0
  %1578 = vmatpush1.msra.mxu0 0.0
  %1579 = vmatprep.subr.mxu0 0.0
  %1580 = vmatpush1.msra.mxu0 0.0
  %1581 = vmatprep.subr.mxu0 0.0
  %1582 = vmatpush1.msra.mxu0 0.0
  %1583 = vmatprep.subr.mxu0 0.0
  %1584 = vmatpush1.msra.mxu0 0.0
  %1585 = vmatprep.subr.mxu0 0.0
  %1586 = vmatpush1.msra.mxu0 0.0
  %1587 = vmatprep.subr.mxu0 0.0
  %1588 = vmatpush1.msra.mxu0 0.0
  %1589 = vmatprep.subr.mxu0 0.0
  %1590 = vmatpush1.msra.mxu0 0.0
  %1591 = vmatprep.subr.mxu0 0.0
  %1592 = vmatpush1.msra.mxu0 0.0
  %1593 = vmatprep.subr.mxu0 0.0
  %1594 = vmatpush1.msra.mxu0 0.0
  %1595 = vmatprep.subr.mxu0 0.0
  %1596 = vmatpush1.msra.mxu0 0.0
  %1597 = vmatprep.subr.mxu0 0.0
  %1598 = vmatpush1.msra.mxu0 0.0
  %1599 = vmatprep.subr.mxu0 0.0
  %1600 = vmatpush1.msra.mxu0 0.0
  %1601 = vmatprep.subr.mxu0 0.0
  %1602 = vmatpush1.msra.mxu0 0.0
  %1603 = vmatprep.subr.mxu0 0.0
  %1604 = vmatpush1.msra.mxu0 0.0
  %1605 = vmatprep.mubr.f32.mxu0 0.0
  %1606 = vmatmul.mubr.f32.gmra.mrb[0].mxu0 %v1539
  %v1607 = vpop.f32.mrb[0].mxu0
  %v1608 = vadd.f32 0.0, %v1607
  %v1609 = vpop.f32.mrb[0].mxu0
  %1610 = vdwg.mxu0
  %v1611 = vadd.f32 %v1533, %v1608
  %v1612 = vtanh.pop %v1611
  %v1613 = vmul.f32 %v1612, %v39
  %v1614 = vadd.f32 %v1613, %v40
  %v1615 = vmul.f32 %v1614, %v1459
  %1617 = vrot.lane.b32.xlu0 %v1614, 64
  %v1618 = vpop.permute.xlu0 %1617
  %v1620 = vmul.f32 %v1614, %v1618
  %1622 = vrot.lane.b32.xlu0 %v1620, 32
  %v1623 = vpop.permute.xlu0 %1622
  %v1625 = vadd.f32 %v1615, %v1623
  %v1626 = vtanh.pop %v1625
  %1628 = vrot.lane.b32.xlu0 %v1626, 64
  %v1629 = vpop.permute.xlu0 %1628
  %v1631 = vmul.f32 %v1614, %v1629
  %1632 = vmatprep.subr.mxu0 0.0
  %1633 = vmatpush1.msra.mxu0 %v958
  %1634 = vmatprep.subr.mxu0 0.0
  %1635 = vmatpush1.msra.mxu0 %v959
  %1636 = vmatprep.subr.mxu0 0.0
  %1637 = vmatpush1.msra.mxu0 %v960
  %1638 = vmatprep.subr.mxu0 0.0
  %1639 = vmatpush1.msra.mxu0 %v961
  %1640 = vmatprep.subr.mxu0 0.0
  %1641 = vmatpush1.msra.mxu0 0.0
  %1642 = vmatprep.subr.mxu0 0.0
  %1643 = vmatpush1.msra.mxu0 0.0
  %1644 = vmatprep.subr.mxu0 0.0
  %1645 = vmatpush1.msra.mxu0 0.0
  %1646 = vmatprep.subr.mxu0 0.0
  %1647 = vmatpush1.msra.mxu0 0.0
  %1648 = vmatprep.subr.mxu0 0.0
  %1649 = vmatpush1.msra.mxu0 0.0
  %1650 = vmatprep.subr.mxu0 0.0
  %1651 = vmatpush1.msra.mxu0 0.0
  %1652 = vmatprep.subr.mxu0 0.0
  %1653 = vmatpush1.msra.mxu0 0.0
  %1654 = vmatprep.subr.mxu0 0.0
  %1655 = vmatpush1.msra.mxu0 0.0
  %1656 = vmatprep.subr.mxu0 0.0
  %1657 = vmatpush1.msra.mxu0 0.0
  %1658 = vmatprep.subr.mxu0 0.0
  %1659 = vmatpush1.msra.mxu0 0.0
  %1660 = vmatprep.subr.mxu0 0.0
  %1661 = vmatpush1.msra.mxu0 0.0
  %1662 = vmatprep.subr.mxu0 0.0
  %1663 = vmatpush1.msra.mxu0 0.0
  %1664 = vmatprep.subr.mxu0 0.0
  %1665 = vmatpush1.msra.mxu0 0.0
  %1666 = vmatprep.subr.mxu0 0.0
  %1667 = vmatpush1.msra.mxu0 0.0
  %1668 = vmatprep.subr.mxu0 0.0
  %1669 = vmatpush1.msra.mxu0 0.0
  %1670 = vmatprep.subr.mxu0 0.0
  %1671 = vmatpush1.msra.mxu0 0.0
  %1672 = vmatprep.subr.mxu0 0.0
  %1673 = vmatpush1.msra.mxu0 0.0
  %1674 = vmatprep.subr.mxu0 0.0
  %1675 = vmatpush1.msra.mxu0 0.0
  %1676 = vmatprep.subr.mxu0 0.0
  %1677 = vmatpush1.msra.mxu0 0.0
  %1678 = vmatprep.subr.mxu0 0.0
  %1679 = vmatpush1.msra.mxu0 0.0
  %1680 = vmatprep.subr.mxu0 0.0
  %1681 = vmatpush1.msra.mxu0 0.0
  %1682 = vmatprep.subr.mxu0 0.0
  %1683 = vmatpush1.msra.mxu0 0.0
  %1684 = vmatprep.subr.mxu0 0.0
  %1685 = vmatpush1.msra.mxu0 0.0
  %1686 = vmatprep.subr.mxu0 0.0
  %1687 = vmatpush1.msra.mxu0 0.0
  %1688 = vmatprep.subr.mxu0 0.0
  %1689 = vmatpush1.msra.mxu0 0.0
  %1690 = vmatprep.subr.mxu0 0.0
  %1691 = vmatpush1.msra.mxu0 0.0
  %1692 = vmatprep.subr.mxu0 0.0
  %1693 = vmatpush1.msra.mxu0 0.0
  %1694 = vmatprep.subr.mxu0 0.0
  %1695 = vmatpush1.msra.mxu0 0.0
  %1696 = vmatprep.mubr.f32.mxu0 0.0
  %1697 = vmatmul.mubr.f32.gmra.mrb[0].mxu0 %v673
  %v1698 = vpop.f32.mrb[0].mxu0
  %v1699 = vadd.f32 %v971, %v1698
  %v1700 = vpop.f32.mrb[0].mxu0
  %1701 = vdwg.mxu0
  %1703 = vrot.lane.b32.xlu0 %v1631, 32
  %v1704 = vpop.permute.xlu0 %1703
  %v1705 = vsel %vm191, %v1704, 0
  %1707 = vmatprep.subr.mxu0 0.0
  %1708 = vmatpush1.msra.mxu0 %v962
  %1709 = vmatprep.subr.mxu0 0.0
  %1710 = vmatpush1.msra.mxu0 %v963
  %1711 = vmatprep.subr.mxu0 0.0
  %1712 = vmatpush1.msra.mxu0 %v964
  %1713 = vmatprep.subr.mxu0 0.0
  %1714 = vmatpush1.msra.mxu0 %v965
  %1715 = vmatprep.subr.mxu0 0.0
  %1716 = vmatpush1.msra.mxu0 0.0
  %1717 = vmatprep.subr.mxu0 0.0
  %1718 = vmatpush1.msra.mxu0 0.0
  %1719 = vmatprep.subr.mxu0 0.0
  %1720 = vmatpush1.msra.mxu0 0.0
  %1721 = vmatprep.subr.mxu0 0.0
  %1722 = vmatpush1.msra.mxu0 0.0
  %1723 = vmatprep.subr.mxu0 0.0
  %1724 = vmatpush1.msra.mxu0 0.0
  %1725 = vmatprep.subr.mxu0 0.0
  %1726 = vmatpush1.msra.mxu0 0.0
  %1727 = vmatprep.subr.mxu0 0.0
  %1728 = vmatpush1.msra.mxu0 0.0
  %1729 = vmatprep.subr.mxu0 0.0
  %1730 = vmatpush1.msra.mxu0 0.0
  %1731 = vmatprep.subr.mxu0 0.0
  %1732 = vmatpush1.msra.mxu0 0.0
  %1733 = vmatprep.subr.mxu0 0.0
  %1734 = vmatpush1.msra.mxu0 0.0
  %1735 = vmatprep.subr.mxu0 0.0
  %1736 = vmatpush1.msra.mxu0 0.0
  %1737 = vmatprep.subr.mxu0 0.0
  %1738 = vmatpush1.msra.mxu0 0.0
  %1739 = vmatprep.subr.mxu0 0.0
  %1740 = vmatpush1.msra.mxu0 0.0
  %1741 = vmatprep.subr.mxu0 0.0
  %1742 = vmatpush1.msra.mxu0 0.0
  %1743 = vmatprep.subr.mxu0 0.0
  %1744 = vmatpush1.msra.mxu0 0.0
  %1745 = vmatprep.subr.mxu0 0.0
  %1746 = vmatpush1.msra.mxu0 0.0
  %1747 = vmatprep.subr.mxu0 0.0
  %1748 = vmatpush1.msra.mxu0 0.0
  %1749 = vmatprep.subr.mxu0 0.0
  %1750 = vmatpush1.msra.mxu0 0.0
  %1751 = vmatprep.subr.mxu0 0.0
  %1752 = vmatpush1.msra.mxu0 0.0
  %1753 = vmatprep.subr.mxu0 0.0
  %1754 = vmatpush1.msra.mxu0 0.0
  %1755 = vmatprep.subr.mxu0 0.0
  %1756 = vmatpush1.msra.mxu0 0.0
  %1757 = vmatprep.subr.mxu0 0.0
  %1758 = vmatpush1.msra.mxu0 0.0
  %1759 = vmatprep.subr.mxu0 0.0
  %1760 = vmatpush1.msra.mxu0 0.0
  %1761 = vmatprep.subr.mxu0 0.0
  %1762 = vmatpush1.msra.mxu0 0.0
  %1763 = vmatprep.subr.mxu0 0.0
  %1764 = vmatpush1.msra.mxu0 0.0
  %1765 = vmatprep.subr.mxu0 0.0
  %1766 = vmatpush1.msra.mxu0 0.0
  %1767 = vmatprep.subr.mxu0 0.0
  %1768 = vmatpush1.msra.mxu0 0.0
  %1769 = vmatprep.subr.mxu0 0.0
  %1770 = vmatpush1.msra.mxu0 0.0
  %1771 = vmatprep.mubr.f32.mxu0 0.0
  %1772 = vmatmul.mubr.f32.gmra.mrb[0].mxu0 %v1705
  %v1773 = vpop.f32.mrb[0].mxu0
  %v1774 = vadd.f32 0.0, %v1773
  %v1775 = vpop.f32.mrb[0].mxu0
  %1776 = vdwg.mxu0
  %v1777 = vadd.f32 %v1699, %v1774
  %v1778 = vtanh.pop %v1777
  %v1779 = vmul.f32 %v1778, %v39
  %v1780 = vadd.f32 %v1779, %v40
  %v1781 = vmul.f32 %v1780, %v1625
  %1783 = vrot.lane.b32.xlu0 %v1780, 64
  %v1784 = vpop.permute.xlu0 %1783
  %v1786 = vmul.f32 %v1780, %v1784
  %1788 = vrot.lane.b32.xlu0 %v1786, 32
  %v1789 = vpop.permute.xlu0 %1788
  %v1791 = vadd.f32 %v1781, %v1789
  %v1792 = vtanh.pop %v1791
  %1794 = vrot.lane.b32.xlu0 %v1792, 64
  %v1795 = vpop.permute.xlu0 %1794
  %v1797 = vmul.f32 %v1780, %v1795
  %1798 = vmatprep.subr.mxu0 0.0
  %1799 = vmatpush1.msra.mxu0 %v958
  %1800 = vmatprep.subr.mxu0 0.0
  %1801 = vmatpush1.msra.mxu0 %v959
  %1802 = vmatprep.subr.mxu0 0.0
  %1803 = vmatpush1.msra.mxu0 %v960
  %1804 = vmatprep.subr.mxu0 0.0
  %1805 = vmatpush1.msra.mxu0 %v961
  %1806 = vmatprep.subr.mxu0 0.0
  %1807 = vmatpush1.msra.mxu0 0.0
  %1808 = vmatprep.subr.mxu0 0.0
  %1809 = vmatpush1.msra.mxu0 0.0
  %1810 = vmatprep.subr.mxu0 0.0
  %1811 = vmatpush1.msra.mxu0 0.0
  %1812 = vmatprep.subr.mxu0 0.0
  %1813 = vmatpush1.msra.mxu0 0.0
  %1814 = vmatprep.subr.mxu0 0.0
  %1815 = vmatpush1.msra.mxu0 0.0
  %1816 = vmatprep.subr.mxu0 0.0
  %1817 = vmatpush1.msra.mxu0 0.0
  %1818 = vmatprep.subr.mxu0 0.0
  %1819 = vmatpush1.msra.mxu0 0.0
  %1820 = vmatprep.subr.mxu0 0.0
  %1821 = vmatpush1.msra.mxu0 0.0
  %1822 = vmatprep.subr.mxu0 0.0
  %1823 = vmatpush1.msra.mxu0 0.0
  %1824 = vmatprep.subr.mxu0 0.0
  %1825 = vmatpush1.msra.mxu0 0.0
  %1826 = vmatprep.subr.mxu0 0.0
  %1827 = vmatpush1.msra.mxu0 0.0
  %1828 = vmatprep.subr.mxu0 0.0
  %1829 = vmatpush1.msra.mxu0 0.0
  %1830 = vmatprep.subr.mxu0 0.0
  %1831 = vmatpush1.msra.mxu0 0.0
  %1832 = vmatprep.subr.mxu0 0.0
  %1833 = vmatpush1.msra.mxu0 0.0
  %1834 = vmatprep.subr.mxu0 0.0
  %1835 = vmatpush1.msra.mxu0 0.0
  %1836 = vmatprep.subr.mxu0 0.0
  %1837 = vmatpush1.msra.mxu0 0.0
  %1838 = vmatprep.subr.mxu0 0.0
  %1839 = vmatpush1.msra.mxu0 0.0
  %1840 = vmatprep.subr.mxu0 0.0
  %1841 = vmatpush1.msra.mxu0 0.0
  %1842 = vmatprep.subr.mxu0 0.0
  %1843 = vmatpush1.msra.mxu0 0.0
  %1844 = vmatprep.subr.mxu0 0.0
  %1845 = vmatpush1.msra.mxu0 0.0
  %1846 = vmatprep.subr.mxu0 0.0
  %1847 = vmatpush1.msra.mxu0 0.0
  %1848 = vmatprep.subr.mxu0 0.0
  %1849 = vmatpush1.msra.mxu0 0.0
  %1850 = vmatprep.subr.mxu0 0.0
  %1851 = vmatpush1.msra.mxu0 0.0
  %1852 = vmatprep.subr.mxu0 0.0
  %1853 = vmatpush1.msra.mxu0 0.0
  %1854 = vmatprep.subr.mxu0 0.0
  %1855 = vmatpush1.msra.mxu0 0.0
  %1856 = vmatprep.subr.mxu0 0.0
  %1857 = vmatpush1.msra.mxu0 0.0
  %1858 = vmatprep.subr.mxu0 0.0
  %1859 = vmatpush1.msra.mxu0 0.0
  %1860 = vmatprep.subr.mxu0 0.0
  %1861 = vmatpush1.msra.mxu0 0.0
  %1862 = vmatprep.mubr.f32.mxu0 0.0
  %1863 = vmatmul.mubr.f32.gmra.mrb[0].mxu0 %v769
  %v1864 = vpop.f32.mrb[0].mxu0
  %v1865 = vadd.f32 %v971, %v1864
  %v1866 = vpop.f32.mrb[0].mxu0
  %1867 = vdwg.mxu0
  %1869 = vrot.lane.b32.xlu0 %v1797, 32
  %v1870 = vpop.permute.xlu0 %1869
  %v1871 = vsel %vm191, %v1870, 0
  %1873 = vmatprep.subr.mxu0 0.0
  %1874 = vmatpush1.msra.mxu0 %v962
  %1875 = vmatprep.subr.mxu0 0.0
  %1876 = vmatpush1.msra.mxu0 %v963
  %1877 = vmatprep.subr.mxu0 0.0
  %1878 = vmatpush1.msra.mxu0 %v964
  %1879 = vmatprep.subr.mxu0 0.0
  %1880 = vmatpush1.msra.mxu0 %v965
  %1881 = vmatprep.subr.mxu0 0.0
  %1882 = vmatpush1.msra.mxu0 0.0
  %1883 = vmatprep.subr.mxu0 0.0
  %1884 = vmatpush1.msra.mxu0 0.0
  %1885 = vmatprep.subr.mxu0 0.0
  %1886 = vmatpush1.msra.mxu0 0.0
  %1887 = vmatprep.subr.mxu0 0.0
  %1888 = vmatpush1.msra.mxu0 0.0
  %1889 = vmatprep.subr.mxu0 0.0
  %1890 = vmatpush1.msra.mxu0 0.0
  %1891 = vmatprep.subr.mxu0 0.0
  %1892 = vmatpush1.msra.mxu0 0.0
  %1893 = vmatprep.subr.mxu0 0.0
  %1894 = vmatpush1.msra.mxu0 0.0
  %1895 = vmatprep.subr.mxu0 0.0
  %1896 = vmatpush1.msra.mxu0 0.0
  %1897 = vmatprep.subr.mxu0 0.0
  %1898 = vmatpush1.msra.mxu0 0.0
  %1899 = vmatprep.subr.mxu0 0.0
  %1900 = vmatpush1.msra.mxu0 0.0
  %1901 = vmatprep.subr.mxu0 0.0
  %1902 = vmatpush1.msra.mxu0 0.0
  %1903 = vmatprep.subr.mxu0 0.0
  %1904 = vmatpush1.msra.mxu0 0.0
  %1905 = vmatprep.subr.mxu0 0.0
  %1906 = vmatpush1.msra.mxu0 0.0
  %1907 = vmatprep.subr.mxu0 0.0
  %1908 = vmatpush1.msra.mxu0 0.0
  %1909 = vmatprep.subr.mxu0 0.0
  %1910 = vmatpush1.msra.mxu0 0.0
  %1911 = vmatprep.subr.mxu0 0.0
  %1912 = vmatpush1.msra.mxu0 0.0
  %1913 = vmatprep.subr.mxu0 0.0
  %1914 = vmatpush1.msra.mxu0 0.0
  %1915 = vmatprep.subr.mxu0 0.0
  %1916 = vmatpush1.msra.mxu0 0.0
  %1917 = vmatprep.subr.mxu0 0.0
  %1918 = vmatpush1.msra.mxu0 0.0
  %1919 = vmatprep.subr.mxu0 0.0
  %1920 = vmatpush1.msra.mxu0 0.0
  %1921 = vmatprep.subr.mxu0 0.0
  %1922 = vmatpush1.msra.mxu0 0.0
  %1923 = vmatprep.subr.mxu0 0.0
  %1924 = vmatpush1.msra.mxu0 0.0
  %1925 = vmatprep.subr.mxu0 0.0
  %1926 = vmatpush1.msra.mxu0 0.0
  %1927 = vmatprep.subr.mxu0 0.0
  %1928 = vmatpush1.msra.mxu0 0.0
  %1929 = vmatprep.subr.mxu0 0.0
  %1930 = vmatpush1.msra.mxu0 0.0
  %1931 = vmatprep.subr.mxu0 0.0
  %1932 = vmatpush1.msra.mxu0 0.0
  %1933 = vmatprep.subr.mxu0 0.0
  %1934 = vmatpush1.msra.mxu0 0.0
  %1935 = vmatprep.subr.mxu0 0.0
  %1936 = vmatpush1.msra.mxu0 0.0
  %1937 = vmatprep.mubr.f32.mxu0 0.0
  %1938 = vmatmul.mubr.f32.gmra.mrb[0].mxu0 %v1871
  %v1939 = vpop.f32.mrb[0].mxu0
  %v1940 = vadd.f32 0.0, %v1939
  %v1941 = vpop.f32.mrb[0].mxu0
  %1942 = vdwg.mxu0
  %v1943 = vadd.f32 %v1865, %v1940
  %v1944 = vtanh.pop %v1943
  %v1945 = vmul.f32 %v1944, %v39
  %v1946 = vadd.f32 %v1945, %v40
  %v1947 = vmul.f32 %v1946, %v1791
  %1949 = vrot.lane.b32.xlu0 %v1946, 64
  %v1950 = vpop.permute.xlu0 %1949
  %v1952 = vmul.f32 %v1946, %v1950
  %1954 = vrot.lane.b32.xlu0 %v1952, 32
  %v1955 = vpop.permute.xlu0 %1954
  %v1957 = vadd.f32 %v1947, %v1955
  %v1958 = vtanh.pop %v1957
  %1960 = vrot.lane.b32.xlu0 %v1958, 64
  %v1961 = vpop.permute.xlu0 %1960
  %v1963 = vmul.f32 %v1946, %v1961
  %1964 = vmatprep.subr.mxu0 0.0
  %1965 = vmatpush1.msra.mxu0 %v958
  %1966 = vmatprep.subr.mxu0 0.0
  %1967 = vmatpush1.msra.mxu0 %v959
  %1968 = vmatprep.subr.mxu0 0.0
  %1969 = vmatpush1.msra.mxu0 %v960
  %1970 = vmatprep.subr.mxu0 0.0
  %1971 = vmatpush1.msra.mxu0 %v961
  %1972 = vmatprep.subr.mxu0 0.0
  %1973 = vmatpush1.msra.mxu0 0.0
  %1974 = vmatprep.subr.mxu0 0.0
  %1975 = vmatpush1.msra.mxu0 0.0
  %1976 = vmatprep.subr.mxu0 0.0
  %1977 = vmatpush1.msra.mxu0 0.0
  %1978 = vmatprep.subr.mxu0 0.0
  %1979 = vmatpush1.msra.mxu0 0.0
  %1980 = vmatprep.subr.mxu0 0.0
  %1981 = vmatpush1.msra.mxu0 0.0
  %1982 = vmatprep.subr.mxu0 0.0
  %1983 = vmatpush1.msra.mxu0 0.0
  %1984 = vmatprep.subr.mxu0 0.0
  %1985 = vmatpush1.msra.mxu0 0.0
  %1986 = vmatprep.subr.mxu0 0.0
  %1987 = vmatpush1.msra.mxu0 0.0
  %1988 = vmatprep.subr.mxu0 0.0
  %1989 = vmatpush1.msra.mxu0 0.0
  %1990 = vmatprep.subr.mxu0 0.0
  %1991 = vmatpush1.msra.mxu0 0.0
  %1992 = vmatprep.subr.mxu0 0.0
  %1993 = vmatpush1.msra.mxu0 0.0
  %1994 = vmatprep.subr.mxu0 0.0
  %1995 = vmatpush1.msra.mxu0 0.0
  %1996 = vmatprep.subr.mxu0 0.0
  %1997 = vmatpush1.msra.mxu0 0.0
  %1998 = vmatprep.subr.mxu0 0.0
  %1999 = vmatpush1.msra.mxu0 0.0
  %2000 = vmatprep.subr.mxu0 0.0
  %2001 = vmatpush1.msra.mxu0 0.0
  %2002 = vmatprep.subr.mxu0 0.0
  %2003 = vmatpush1.msra.mxu0 0.0
  %2004 = vmatprep.subr.mxu0 0.0
  %2005 = vmatpush1.msra.mxu0 0.0
  %2006 = vmatprep.subr.mxu0 0.0
  %2007 = vmatpush1.msra.mxu0 0.0
  %2008 = vmatprep.subr.mxu0 0.0
  %2009 = vmatpush1.msra.mxu0 0.0
  %2010 = vmatprep.subr.mxu0 0.0
  %2011 = vmatpush1.msra.mxu0 0.0
  %2012 = vmatprep.subr.mxu0 0.0
  %2013 = vmatpush1.msra.mxu0 0.0
  %2014 = vmatprep.subr.mxu0 0.0
  %2015 = vmatpush1.msra.mxu0 0.0
  %2016 = vmatprep.subr.mxu0 0.0
  %2017 = vmatpush1.msra.mxu0 0.0
  %2018 = vmatprep.subr.mxu0 0.0
  %2019 = vmatpush1.msra.mxu0 0.0
  %2020 = vmatprep.subr.mxu0 0.0
  %2021 = vmatpush1.msra.mxu0 0.0
  %2022 = vmatprep.subr.mxu0 0.0
  %2023 = vmatpush1.msra.mxu0 0.0
  %2024 = vmatprep.subr.mxu0 0.0
  %2025 = vmatpush1.msra.mxu0 0.0
  %2026 = vmatprep.subr.mxu0 0.0
  %2027 = vmatpush1.msra.mxu0 0.0
  %2028 = vmatprep.mubr.f32.mxu0 0.0
  %2029 = vmatmul.mubr.f32.gmra.mrb[0].mxu0 %v865
  %v2030 = vpop.f32.mrb[0].mxu0
  %v2031 = vadd.f32 %v971, %v2030
  %v2032 = vpop.f32.mrb[0].mxu0
  %2033 = vdwg.mxu0
  %2035 = vrot.lane.b32.xlu0 %v1963, 32
  %v2036 = vpop.permute.xlu0 %2035
  %v2037 = vsel %vm191, %v2036, 0
  %2039 = vmatprep.subr.mxu0 0.0
  %2040 = vmatpush1.msra.mxu0 %v962
  %2041 = vmatprep.subr.mxu0 0.0
  %2042 = vmatpush1.msra.mxu0 %v963
  %2043 = vmatprep.subr.mxu0 0.0
  %2044 = vmatpush1.msra.mxu0 %v964
  %2045 = vmatprep.subr.mxu0 0.0
  %2046 = vmatpush1.msra.mxu0 %v965
  %2047 = vmatprep.subr.mxu0 0.0
  %2048 = vmatpush1.msra.mxu0 0.0
  %2049 = vmatprep.subr.mxu0 0.0
  %2050 = vmatpush1.msra.mxu0 0.0
  %2051 = vmatprep.subr.mxu0 0.0
  %2052 = vmatpush1.msra.mxu0 0.0
  %2053 = vmatprep.subr.mxu0 0.0
  %2054 = vmatpush1.msra.mxu0 0.0
  %2055 = vmatprep.subr.mxu0 0.0
  %2056 = vmatpush1.msra.mxu0 0.0
  %2057 = vmatprep.subr.mxu0 0.0
  %2058 = vmatpush1.msra.mxu0 0.0
  %2059 = vmatprep.subr.mxu0 0.0
  %2060 = vmatpush1.msra.mxu0 0.0
  %2061 = vmatprep.subr.mxu0 0.0
  %2062 = vmatpush1.msra.mxu0 0.0
  %2063 = vmatprep.subr.mxu0 0.0
  %2064 = vmatpush1.msra.mxu0 0.0
  %2065 = vmatprep.subr.mxu0 0.0
  %2066 = vmatpush1.msra.mxu0 0.0
  %2067 = vmatprep.subr.mxu0 0.0
  %2068 = vmatpush1.msra.mxu0 0.0
  %2069 = vmatprep.subr.mxu0 0.0
  %2070 = vmatpush1.msra.mxu0 0.0
  %2071 = vmatprep.subr.mxu0 0.0
  %2072 = vmatpush1.msra.mxu0 0.0
  %2073 = vmatprep.subr.mxu0 0.0
  %2074 = vmatpush1.msra.mxu0 0.0
  %2075 = vmatprep.subr.mxu0 0.0
  %2076 = vmatpush1.msra.mxu0 0.0
  %2077 = vmatprep.subr.mxu0 0.0
  %2078 = vmatpush1.msra.mxu0 0.0
  %2079 = vmatprep.subr.mxu0 0.0
  %2080 = vmatpush1.msra.mxu0 0.0
  %2081 = vmatprep.subr.mxu0 0.0
  %2082 = vmatpush1.msra.mxu0 0.0
  %2083 = vmatprep.subr.mxu0 0.0
  %2084 = vmatpush1.msra.mxu0 0.0
  %2085 = vmatprep.subr.mxu0 0.0
  %2086 = vmatpush1.msra.mxu0 0.0
  %2087 = vmatprep.subr.mxu0 0.0
  %2088 = vmatpush1.msra.mxu0 0.0
  %2089 = vmatprep.subr.mxu0 0.0
  %2090 = vmatpush1.msra.mxu0 0.0
  %2091 = vmatprep.subr.mxu0 0.0
  %2092 = vmatpush1.msra.mxu0 0.0
  %2093 = vmatprep.subr.mxu0 0.0
  %2094 = vmatpush1.msra.mxu0 0.0
  %2095 = vmatprep.subr.mxu0 0.0
  %2096 = vmatpush1.msra.mxu0 0.0
  %2097 = vmatprep.subr.mxu0 0.0
  %2098 = vmatpush1.msra.mxu0 0.0
  %2099 = vmatprep.subr.mxu0 0.0
  %2100 = vmatpush1.msra.mxu0 0.0
  %2101 = vmatprep.subr.mxu0 0.0
  %2102 = vmatpush1.msra.mxu0 0.0
  %2103 = vmatprep.mubr.f32.mxu0 0.0
  %2104 = vmatmul.mubr.f32.gmra.mrb[0].mxu0 %v2037
  %v2105 = vpop.f32.mrb[0].mxu0
  %v2106 = vadd.f32 0.0, %v2105
  %v2107 = vpop.f32.mrb[0].mxu0
  %2108 = vdwg.mxu0
  %v2109 = vadd.f32 %v2031, %v2106
  %v2110 = vtanh.pop %v2109
  %v2111 = vmul.f32 %v2110, %v39
  %v2112 = vadd.f32 %v2111, %v40
  %v2113 = vmul.f32 %v2112, %v1957
  %2115 = vrot.lane.b32.xlu0 %v2112, 64
  %v2116 = vpop.permute.xlu0 %2115
  %v2118 = vmul.f32 %v2112, %v2116
  %2120 = vrot.lane.b32.xlu0 %v2118, 32
  %v2121 = vpop.permute.xlu0 %2120
  %v2123 = vadd.f32 %v2113, %v2121
  %v2124 = vtanh.pop %v2123
  %2126 = vrot.lane.b32.xlu0 %v2124, 64
  %v2127 = vpop.permute.xlu0 %2126
  %v2129 = vmul.f32 %v2112, %v2127
  %2131 = vrot.lane.b32.xlu0 %v957, 32
  %v2132 = vpop.permute.xlu0 %2131
  %v2133 = vsel %vm191, %v2132, 0
  %2135 = vmatprep.subr.mxu0 0.0
  %2136 = vmatpush1.msra.mxu0 %v958
  %2137 = vmatprep.subr.mxu0 0.0
  %2138 = vmatpush1.msra.mxu0 %v959
  %2139 = vmatprep.subr.mxu0 0.0
  %2140 = vmatpush1.msra.mxu0 %v960
  %2141 = vmatprep.subr.mxu0 0.0
  %2142 = vmatpush1.msra.mxu0 %v961
  %2143 = vmatprep.subr.mxu0 0.0
  %2144 = vmatpush1.msra.mxu0 0.0
  %2145 = vmatprep.subr.mxu0 0.0
  %2146 = vmatpush1.msra.mxu0 0.0
  %2147 = vmatprep.subr.mxu0 0.0
  %2148 = vmatpush1.msra.mxu0 0.0
  %2149 = vmatprep.subr.mxu0 0.0
  %2150 = vmatpush1.msra.mxu0 0.0
  %2151 = vmatprep.subr.mxu0 0.0
  %2152 = vmatpush1.msra.mxu0 0.0
  %2153 = vmatprep.subr.mxu0 0.0
  %2154 = vmatpush1.msra.mxu0 0.0
  %2155 = vmatprep.subr.mxu0 0.0
  %2156 = vmatpush1.msra.mxu0 0.0
  %2157 = vmatprep.subr.mxu0 0.0
  %2158 = vmatpush1.msra.mxu0 0.0
  %2159 = vmatprep.subr.mxu0 0.0
  %2160 = vmatpush1.msra.mxu0 0.0
  %2161 = vmatprep.subr.mxu0 0.0
  %2162 = vmatpush1.msra.mxu0 0.0
  %2163 = vmatprep.subr.mxu0 0.0
  %2164 = vmatpush1.msra.mxu0 0.0
  %2165 = vmatprep.subr.mxu0 0.0
  %2166 = vmatpush1.msra.mxu0 0.0
  %2167 = vmatprep.subr.mxu0 0.0
  %2168 = vmatpush1.msra.mxu0 0.0
  %2169 = vmatprep.subr.mxu0 0.0
  %2170 = vmatpush1.msra.mxu0 0.0
  %2171 = vmatprep.subr.mxu0 0.0
  %2172 = vmatpush1.msra.mxu0 0.0
  %2173 = vmatprep.subr.mxu0 0.0
  %2174 = vmatpush1.msra.mxu0 0.0
  %2175 = vmatprep.subr.mxu0 0.0
  %2176 = vmatpush1.msra.mxu0 0.0
  %2177 = vmatprep.subr.mxu0 0.0
  %2178 = vmatpush1.msra.mxu0 0.0
  %2179 = vmatprep.subr.mxu0 0.0
  %2180 = vmatpush1.msra.mxu0 0.0
  %2181 = vmatprep.subr.mxu0 0.0
  %2182 = vmatpush1.msra.mxu0 0.0
  %2183 = vmatprep.subr.mxu0 0.0
  %2184 = vmatpush1.msra.mxu0 0.0
  %2185 = vmatprep.subr.mxu0 0.0
  %2186 = vmatpush1.msra.mxu0 0.0
  %2187 = vmatprep.subr.mxu0 0.0
  %2188 = vmatpush1.msra.mxu0 0.0
  %2189 = vmatprep.subr.mxu0 0.0
  %2190 = vmatpush1.msra.mxu0 0.0
  %2191 = vmatprep.subr.mxu0 0.0
  %2192 = vmatpush1.msra.mxu0 0.0
  %2193 = vmatprep.subr.mxu0 0.0
  %2194 = vmatpush1.msra.mxu0 0.0
  %2195 = vmatprep.subr.mxu0 0.0
  %2196 = vmatpush1.msra.mxu0 0.0
  %2197 = vmatprep.subr.mxu0 0.0
  %2198 = vmatpush1.msra.mxu0 0.0
  %2199 = vmatprep.mubr.f32.mxu0 0.0
  %2200 = vmatmul.mubr.f32.gmra.mrb[0].mxu0 %v2133
  %v2201 = vpop.f32.mrb[0].mxu0
  %v2202 = vadd.f32 %v971, %v2201
  %v2203 = vpop.f32.mrb[0].mxu0
  %2204 = vdwg.mxu0
  %2206 = vrot.lane.b32.xlu0 %v2129, 32
  %v2207 = vpop.permute.xlu0 %2206
  %v2208 = vsel %vm191, %v2207, 0
  %2210 = vmatprep.subr.mxu0 0.0
  %2211 = vmatpush1.msra.mxu0 %v962
  %2212 = vmatprep.subr.mxu0 0.0
  %2213 = vmatpush1.msra.mxu0 %v963
  %2214 = vmatprep.subr.mxu0 0.0
  %2215 = vmatpush1.msra.mxu0 %v964
  %2216 = vmatprep.subr.mxu0 0.0
  %2217 = vmatpush1.msra.mxu0 %v965
  %2218 = vmatprep.subr.mxu0 0.0
  %2219 = vmatpush1.msra.mxu0 0.0
  %2220 = vmatprep.subr.mxu0 0.0
  %2221 = vmatpush1.msra.mxu0 0.0
  %2222 = vmatprep.subr.mxu0 0.0
  %2223 = vmatpush1.msra.mxu0 0.0
  %2224 = vmatprep.subr.mxu0 0.0
  %2225 = vmatpush1.msra.mxu0 0.0
  %2226 = vmatprep.subr.mxu0 0.0
  %2227 = vmatpush1.msra.mxu0 0.0
  %2228 = vmatprep.subr.mxu0 0.0
  %2229 = vmatpush1.msra.mxu0 0.0
  %2230 = vmatprep.subr.mxu0 0.0
  %2231 = vmatpush1.msra.mxu0 0.0
  %2232 = vmatprep.subr.mxu0 0.0
  %2233 = vmatpush1.msra.mxu0 0.0
  %2234 = vmatprep.subr.mxu0 0.0
  %2235 = vmatpush1.msra.mxu0 0.0
  %2236 = vmatprep.subr.mxu0 0.0
  %2237 = vmatpush1.msra.mxu0 0.0
  %2238 = vmatprep.subr.mxu0 0.0
  %2239 = vmatpush1.msra.mxu0 0.0
  %2240 = vmatprep.subr.mxu0 0.0
  %2241 = vmatpush1.msra.mxu0 0.0
  %2242 = vmatprep.subr.mxu0 0.0
  %2243 = vmatpush1.msra.mxu0 0.0
  %2244 = vmatprep.subr.mxu0 0.0
  %2245 = vmatpush1.msra.mxu0 0.0
  %2246 = vmatprep.subr.mxu0 0.0
  %2247 = vmatpush1.msra.mxu0 0.0
  %2248 = vmatprep.subr.mxu0 0.0
  %2249 = vmatpush1.msra.mxu0 0.0
  %2250 = vmatprep.subr.mxu0 0.0
  %2251 = vmatpush1.msra.mxu0 0.0
  %2252 = vmatprep.subr.mxu0 0.0
  %2253 = vmatpush1.msra.mxu0 0.0
  %2254 = vmatprep.subr.mxu0 0.0
  %2255 = vmatpush1.msra.mxu0 0.0
  %2256 = vmatprep.subr.mxu0 0.0
  %2257 = vmatpush1.msra.mxu0 0.0
  %2258 = vmatprep.subr.mxu0 0.0
  %2259 = vmatpush1.msra.mxu0 0.0
  %2260 = vmatprep.subr.mxu0 0.0
  %2261 = vmatpush1.msra.mxu0 0.0
  %2262 = vmatprep.subr.mxu0 0.0
  %2263 = vmatpush1.msra.mxu0 0.0
  %2264 = vmatprep.subr.mxu0 0.0
  %2265 = vmatpush1.msra.mxu0 0.0
  %2266 = vmatprep.subr.mxu0 0.0
  %2267 = vmatpush1.msra.mxu0 0.0
  %2268 = vmatprep.subr.mxu0 0.0
  %2269 = vmatpush1.msra.mxu0 0.0
  %2270 = vmatprep.subr.mxu0 0.0
  %2271 = vmatpush1.msra.mxu0 0.0
  %2272 = vmatprep.subr.mxu0 0.0
  %2273 = vmatpush1.msra.mxu0 0.0
  %2274 = vmatprep.mubr.f32.mxu0 0.0
  %2275 = vmatmul.mubr.f32.gmra.mrb[0].mxu0 %v2208
  %v2276 = vpop.f32.mrb[0].mxu0
  %v2277 = vadd.f32 0.0, %v2276
  %v2278 = vpop.f32.mrb[0].mxu0
  %2279 = vdwg.mxu0
  %v2280 = vadd.f32 %v2202, %v2277
  %v2281 = vtanh.pop %v2280
  %v2282 = vmul.f32 %v2281, %v39
  %v2283 = vadd.f32 %v2282, %v40
  %v2284 = vmul.f32 %v2283, %v2123
  %2286 = vrot.lane.b32.xlu0 %v2283, 64
  %v2287 = vpop.permute.xlu0 %2286
  %v2289 = vmul.f32 %v2283, %v2287
  %2291 = vrot.lane.b32.xlu0 %v2289, 32
  %v2292 = vpop.permute.xlu0 %2291
  %v2294 = vadd.f32 %v2284, %v2292
  %v2295 = vtanh.pop %v2294
  %2297 = vrot.lane.b32.xlu0 %v2295, 64
  %v2298 = vpop.permute.xlu0 %2297
  %v2300 = vmul.f32 %v2283, %v2298
  %v2301 = vld [vmem:[%s7] sm:$0xff]
  %v2302 = vld [vmem:[%s7 + $0x8] sm:$0xff]
  %v2303 = vld [vmem:[%s7 + $0x10] sm:$0xff]
  %v2304 = vld [vmem:[%s7 + $0x18] sm:$0xff]
  %v2305 = vld [vmem:[#allocation2] sm:$0x1]
  %v2307 = vlaneseq
  %v2308 = vshrl.u32 %v2307, 7
  %v2309 = vsub.s32 0, %v2308
  %v2310 = vrot.slane %v2305, %v2309
  %2313 = vrot.lane.b32.xlu0 %v2300, 32
  %v2314 = vpop.permute.xlu0 %2313
  %v2315 = vsel %vm191, %v2314, 0
  %2317 = vmatprep.subr.mxu0 0.0
  %2318 = vmatpush1.msra.mxu0 %v2301
  %2319 = vmatprep.subr.mxu0 0.0
  %2320 = vmatpush1.msra.mxu0 %v2302
  %2321 = vmatprep.subr.mxu0 0.0
  %2322 = vmatpush1.msra.mxu0 %v2303
  %2323 = vmatprep.subr.mxu0 0.0
  %2324 = vmatpush1.msra.mxu0 %v2304
  %2325 = vmatprep.subr.mxu0 0.0
  %2326 = vmatpush1.msra.mxu0 0.0
  %2327 = vmatprep.subr.mxu0 0.0
  %2328 = vmatpush1.msra.mxu0 0.0
  %2329 = vmatprep.subr.mxu0 0.0
  %2330 = vmatpush1.msra.mxu0 0.0
  %2331 = vmatprep.subr.mxu0 0.0
  %2332 = vmatpush1.msra.mxu0 0.0
  %2333 = vmatprep.subr.mxu0 0.0
  %2334 = vmatpush1.msra.mxu0 0.0
  %2335 = vmatprep.subr.mxu0 0.0
  %2336 = vmatpush1.msra.mxu0 0.0
  %2337 = vmatprep.subr.mxu0 0.0
  %2338 = vmatpush1.msra.mxu0 0.0
  %2339 = vmatprep.subr.mxu0 0.0
  %2340 = vmatpush1.msra.mxu0 0.0
  %2341 = vmatprep.subr.mxu0 0.0
  %2342 = vmatpush1.msra.mxu0 0.0
  %2343 = vmatprep.subr.mxu0 0.0
  %2344 = vmatpush1.msra.mxu0 0.0
  %2345 = vmatprep.subr.mxu0 0.0
  %2346 = vmatpush1.msra.mxu0 0.0
  %2347 = vmatprep.subr.mxu0 0.0
  %2348 = vmatpush1.msra.mxu0 0.0
  %2349 = vmatprep.subr.mxu0 0.0
  %2350 = vmatpush1.msra.mxu0 0.0
  %2351 = vmatprep.subr.mxu0 0.0
  %2352 = vmatpush1.msra.mxu0 0.0
  %2353 = vmatprep.subr.mxu0 0.0
  %2354 = vmatpush1.msra.mxu0 0.0
  %2355 = vmatprep.subr.mxu0 0.0
  %2356 = vmatpush1.msra.mxu0 0.0
  %2357 = vmatprep.subr.mxu0 0.0
  %2358 = vmatpush1.msra.mxu0 0.0
  %2359 = vmatprep.subr.mxu0 0.0
  %2360 = vmatpush1.msra.mxu0 0.0
  %2361 = vmatprep.subr.mxu0 0.0
  %2362 = vmatpush1.msra.mxu0 0.0
  %2363 = vmatprep.subr.mxu0 0.0
  %2364 = vmatpush1.msra.mxu0 0.0
  %2365 = vmatprep.subr.mxu0 0.0
  %2366 = vmatpush1.msra.mxu0 0.0
  %2367 = vmatprep.subr.mxu0 0.0
  %2368 = vmatpush1.msra.mxu0 0.0
  %2369 = vmatprep.subr.mxu0 0.0
  %2370 = vmatpush1.msra.mxu0 0.0
  %2371 = vmatprep.subr.mxu0 0.0
  %2372 = vmatpush1.msra.mxu0 0.0
  %2373 = vmatprep.subr.mxu0 0.0
  %2374 = vmatpush1.msra.mxu0 0.0
  %2375 = vmatprep.subr.mxu0 0.0
  %2376 = vmatpush1.msra.mxu0 0.0
  %2377 = vmatprep.subr.mxu0 0.0
  %2378 = vmatpush1.msra.mxu0 0.0
  %2379 = vmatprep.subr.mxu0 0.0
  %2380 = vmatpush1.msra.mxu0 0.0
  %2381 = vmatprep.mubr.f32.mxu0 0.0
  %2382 = vmatmul.mubr.f32.gmra.mrb[0].mxu0 %v2315
  %v2383 = vpop.f32.mrb[0].mxu0
  %v2384 = vadd.f32 %v2310, %v2383
  %v2385 = vpop.f32.mrb[0].mxu0
  %2386 = vdwg.mxu0
  %vm2387 = vcmask 7168
  %2388 = vst.msk [vmem:[%s9] sm:$0xff] %vm2387, %v2384
  // Predicated region
  $region38: #{tpu_custom_call.1} parent=0 // pred_check
    _
  $region39: #{tpu_custom_call.1} parent=0 // pred_check_branch
    %2390 = sbr.rel (0) target = $region41
  $region40: #{tpu_custom_call.1} parent=0 // pred_region
    _
  $region41: #{tpu_custom_call.1} parent=0 // pred_fallthru
    _
  // Predicated region
  $region42: #{tpu_custom_call.1} parent=0 // pred_check
    _
  $region43: #{tpu_custom_call.1} parent=0 // pred_check_branch
    %2392 = sbr.rel (0) target = $region45
  $region44: #{tpu_custom_call.1} parent=0 // pred_region
    _
  $region45: #{tpu_custom_call.1} parent=0 // pred_fallthru
    _

</llo_original>
